<compile_context>
chip_gen: v6e
topology: v6e:2x2x1
jax: 0.10.0
libtpu: 0.0.40
codegen_flags: <defaults>
</compile_context>

<pallas_src>
import jax
import jax.numpy as jnp
from jax.experimental import pallas as pl
from jax.experimental.pallas import tpu as pltpu


HIDDEN = 768          # self.input_dim in the PyTorch module (fixed)
INTERMEDIATE = 512    # nn.Linear(768, 512)
NUM_LABELS = 19       # num_tags (propaganda technique tags)

_ROW_ALIGN = 16       # bf16 sublane packing: keep row tiles a multiple of 16


def _round_up(x, m):
    return ((x + m - 1) // m) * m


def _head_kernel(x_ref, w1_ref, b1_ref, w2_ref, b2_ref, out_ref):
    """Fused Linear(768,512) -> ReLU -> Linear(512, L_pad) over one row tile.

    bf16 operands feed the MXU; accumulation, bias add and ReLU run in f32.
    """
    # First linear (MXU, bf16 x bf16 -> f32 accumulate) + bias + ReLU (VPU).
    h = jnp.dot(x_ref[...], w1_ref[...], preferred_element_type=jnp.float32)
    h = jnp.maximum(h + b1_ref[...], 0.0)                       # (T, 512) f32
    # Second linear (cast activations back to bf16 for the MXU, f32 accumulate).
    logits = jnp.dot(h.astype(w2_ref.dtype), w2_ref[...],
                     preferred_element_type=jnp.float32)        # (T, L_pad)
    out_ref[...] = (logits + b2_ref[...]).astype(out_ref.dtype)


def linear_relu_stack_pallas(x, w1, b1, w2, b2, *, tile_n=512):
    """x: (N, 768) float32 -> logits: (N, num_labels) float32.

    tile_n: row tile (tokens per grid step).  Default 512 keeps the double-buffered
    x/out tiles ~2.3 MiB total with bf16 inputs — comfortably inside the scoped-VMEM
    default on v5e (16 MiB), v6e (32 MiB) and v7x (32 MiB), while feeding the MXU
    with full 256-row passes on v6e/v7x (128 on v5e).
    """
    n, d = x.shape
    assert d == HIDDEN
    num_labels = w2.shape[1]

    # Lane-dense output: pad the label dim up to a full 128-lane register.
    labels_pad = _round_up(num_labels, 128)

    # Row tiling: multiple of 16, capped at the (row-aligned) token count.
    n_aligned = _round_up(n, _ROW_ALIGN)
    tile = min(_round_up(tile_n, _ROW_ALIGN), n_aligned)
    n_padded = _round_up(n, tile)
    grid = (n_padded // tile,)

    # Pad + cast operands at the pallas_call boundary.
    x_p = x if n_padded == n else jnp.pad(x, ((0, n_padded - n), (0, 0)))
    x_bf = x_p.astype(jnp.bfloat16)
    w1_bf = w1.astype(jnp.bfloat16)
    w2_bf = jnp.pad(w2, ((0, 0), (0, labels_pad - num_labels))).astype(jnp.bfloat16)
    b1_2d = b1.reshape(1, INTERMEDIATE).astype(jnp.float32)
    b2_2d = jnp.pad(b2, (0, labels_pad - num_labels)).reshape(1, labels_pad)
    b2_2d = b2_2d.astype(jnp.float32)

    # Weights / biases never change across grid steps -> single-buffered residents.
    resident = pl.Buffered(1)

    out = pl.pallas_call(
        _head_kernel,
        out_shape=jax.ShapeDtypeStruct((n_padded, labels_pad), jnp.float32),
        grid_spec=pltpu.PrefetchScalarGridSpec(
            num_scalar_prefetch=0,
            grid=grid,
            in_specs=[
                pl.BlockSpec((tile, HIDDEN), lambda i: (i, 0)),            # x tile
                pl.BlockSpec((HIDDEN, INTERMEDIATE), lambda i: (0, 0),     # W1 resident
                             pipeline_mode=resident),
                pl.BlockSpec((1, INTERMEDIATE), lambda i: (0, 0),          # b1 resident
                             pipeline_mode=resident),
                pl.BlockSpec((INTERMEDIATE, labels_pad), lambda i: (0, 0), # W2 resident
                             pipeline_mode=resident),
                pl.BlockSpec((1, labels_pad), lambda i: (0, 0),            # b2 resident
                             pipeline_mode=resident),
            ],
            out_specs=pl.BlockSpec((tile, labels_pad), lambda i: (i, 0)),
        ),
        compiler_params=pltpu.CompilerParams(
            dimension_semantics=("parallel",),   # row space shards across TCs (v7x)
        ),
    )(x_bf, w1_bf, b1_2d, w2_bf, b2_2d)

    # Strip the row padding and the lane padding added for the kernel.
    return out[:n, :num_labels]


def propaganda_detection_forward(input_ids, params, *, tile_n=512):
    """Inference branch of Propaganda_Detection.forward (training falsy).

    Returns logits of shape (batch*seq_len, num_labels), matching
    `self.linear_relu_stack(sequence_output.view(-1, 768))`.
    """
    # TODO(synk): pretrained BERT encoder (AutoModel.from_pretrained) has no
    # in-script equivalent; a deterministic embedding lookup stands in for the
    # encoder's last_hidden_state (outputs[0]) of shape (B, S, 768).
    # TODO(synk): this gather could be fused into the kernel's x-tile DMA via
    # scalar-prefetched input_ids (pl.Element row gather) to skip the HBM round-trip.
    sequence_output = params["embedding_table"][input_ids]          # (B, S, 768)

    b, s, d = sequence_output.shape
    x = sequence_output.reshape(b * s, d)                           # .view(-1, 768)
    return linear_relu_stack_pallas(
        x, params["w1"], params["b1"], params["w2"], params["b2"], tile_n=tile_n
    )


def init_params(key, vocab_size=128):
    k_emb, k_w1, k_b1, k_w2, k_b2 = jax.random.split(key, 5)
    # Deterministic synthetic parameters (shapes follow the module's __init__).
    embedding_table = jax.random.normal(k_emb, (vocab_size, HIDDEN), jnp.float32) * 0.02
    w1 = jax.random.normal(k_w1, (HIDDEN, INTERMEDIATE), jnp.float32) * (1.0 / HIDDEN ** 0.5)
    b1 = jax.random.normal(k_b1, (INTERMEDIATE,), jnp.float32) * 0.01
    w2 = jax.random.normal(k_w2, (INTERMEDIATE, NUM_LABELS), jnp.float32) * (1.0 / INTERMEDIATE ** 0.5)
    b2 = jax.random.normal(k_b2, (NUM_LABELS,), jnp.float32) * 0.01
    return {
        "embedding_table": embedding_table,
        "w1": w1, "b1": b1,
        "w2": w2, "b2": b2,
    }


def _reference_logits(input_ids, params):
    x_ref = params["embedding_table"][input_ids].reshape(-1, HIDDEN)
    h_ref = jnp.maximum(x_ref @ params["w1"] + params["b1"], 0.0)
    return h_ref @ params["w2"] + params["b2"]


if __name__ == "__main__":
    key = jax.random.PRNGKey(0)
    params = init_params(key)

    # --- primary small-shape check (batch=2, seq=8) -----------------------------
    batch, seq_len, vocab = 2, 8, 128
    input_ids = jax.random.randint(
        jax.random.fold_in(key, 1), (batch, seq_len), 0, vocab, dtype=jnp.int32
    )

    logits = propaganda_detection_forward(input_ids, params)
    logits = jax.block_until_ready(logits)
    assert logits.shape == (batch * seq_len, NUM_LABELS)
    assert logits.dtype == jnp.float32

    ref = _reference_logits(input_ids, params)
    # bf16 operands with f32 accumulation: loosen tolerance accordingly.
    assert jnp.allclose(logits, ref, atol=2e-2, rtol=2e-2)

    # --- multi-tile + row-padding check (N=120, tile_n=32 -> grid of 4) ---------
    input_ids2 = jax.random.randint(
        jax.random.fold_in(key, 2), (3, 40), 0, vocab, dtype=jnp.int32
    )
    logits2 = propaganda_detection_forward(input_ids2, params, tile_n=32)
    logits2 = jax.block_until_ready(logits2)
    assert logits2.shape == (3 * 40, NUM_LABELS)
    ref2 = _reference_logits(input_ids2, params)
    assert jnp.allclose(logits2, ref2, atol=2e-2, rtol=2e-2)

    print("KERNEL_OK")
</pallas_src>

<mosaic_0001>
module attributes {stable_mosaic.version = 11 : i64} {
  func.func @_head_kernel(%arg0: i32, %arg1: memref<16x768xbf16, #tpu.memory_space<vmem>>, %arg2: memref<768x512xbf16, #tpu.memory_space<vmem>>, %arg3: memref<1x512xf32, #tpu.memory_space<vmem>>, %arg4: memref<512x128xbf16, #tpu.memory_space<vmem>>, %arg5: memref<1x128xf32, #tpu.memory_space<vmem>>, %arg6: memref<16x128xf32, #tpu.memory_space<vmem>>) attributes {dimension_semantics = [#tpu.dimension_semantics<parallel>], iteration_bounds = array<i64: 1>, scalar_prefetch = 0 : i64, scratch_operands = 0 : i64, tpu.core_type = #tpu.core_type<tc>, window_params = [{transform_indices = @transform_0, window_bounds = array<i64: 16, 768>}, {pipeline_mode = #tpu.pipeline_mode<synchronous>, transform_indices = @transform_1, window_bounds = array<i64: 768, 512>}, {pipeline_mode = #tpu.pipeline_mode<synchronous>, transform_indices = @transform_2, window_bounds = array<i64: 1, 512>}, {pipeline_mode = #tpu.pipeline_mode<synchronous>, transform_indices = @transform_3, window_bounds = array<i64: 512, 128>}, {pipeline_mode = #tpu.pipeline_mode<synchronous>, transform_indices = @transform_4, window_bounds = array<i64: 1, 128>}, {transform_indices = @transform_5, window_bounds = array<i64: 16, 128>}]} {
    %c0 = arith.constant 0 : index
    %c0_0 = arith.constant 0 : index
    %0 = vector.load %arg1[%c0, %c0_0] : memref<16x768xbf16, #tpu.memory_space<vmem>>, vector<16x768xbf16>
    %c0_1 = arith.constant 0 : index
    %c0_2 = arith.constant 0 : index
    %1 = vector.load %arg2[%c0_1, %c0_2] : memref<768x512xbf16, #tpu.memory_space<vmem>>, vector<768x512xbf16>
    %cst = arith.constant dense<0.000000e+00> : vector<16x512xf32>
    %2 = tpu.matmul %0, %1, %cst {dimension_numbers = #tpu.dot_dimension_numbers<[1], [0], [0], [1], [0, 0, 1, 1], [], []>} : vector<16x768xbf16>, vector<768x512xbf16>, vector<16x512xf32> -> vector<16x512xf32>
    %c0_3 = arith.constant 0 : index
    %c0_4 = arith.constant 0 : index
    %3 = vector.load %arg3[%c0_3, %c0_4] : memref<1x512xf32, #tpu.memory_space<vmem>>, vector<1x512xf32>
    %4 = vector.broadcast %3 : vector<1x512xf32> to vector<16x512xf32>
    %5 = arith.addf %2, %4 : vector<16x512xf32>
    %cst_5 = arith.constant 0.000000e+00 : f32
    %6 = vector.broadcast %cst_5 : f32 to vector<16x512xf32>
    %7 = arith.maximumf %5, %6 : vector<16x512xf32>
    %8 = arith.truncf %7 : vector<16x512xf32> to vector<16x512xbf16>
    %c0_6 = arith.constant 0 : index
    %c0_7 = arith.constant 0 : index
    %9 = vector.load %arg4[%c0_6, %c0_7] : memref<512x128xbf16, #tpu.memory_space<vmem>>, vector<512x128xbf16>
    %cst_8 = arith.constant dense<0.000000e+00> : vector<16x128xf32>
    %10 = tpu.matmul %8, %9, %cst_8 {dimension_numbers = #tpu.dot_dimension_numbers<[1], [0], [0], [1], [0, 0, 1, 1], [], []>} : vector<16x512xbf16>, vector<512x128xbf16>, vector<16x128xf32> -> vector<16x128xf32>
    %c0_9 = arith.constant 0 : index
    %c0_10 = arith.constant 0 : index
    %11 = vector.load %arg5[%c0_9, %c0_10] : memref<1x128xf32, #tpu.memory_space<vmem>>, vector<1x128xf32>
    %12 = vector.broadcast %11 : vector<1x128xf32> to vector<16x128xf32>
    %13 = arith.addf %10, %12 : vector<16x128xf32>
    %c0_11 = arith.constant 0 : index
    %c0_12 = arith.constant 0 : index
    %14 = vector.load %arg6[%c0_11, %c0_12] : memref<16x128xf32, #tpu.memory_space<vmem>>, vector<16x128xf32>
    tpu.vector_store %arg6[%c0_11, %c0_12], %13 {strides = array<i32>} : memref<16x128xf32, #tpu.memory_space<vmem>>, vector<16x128xf32>,
    return
  }
  func.func @transform_0(%arg0: i32) -> (i32, i32) {
    %c0_i32 = arith.constant 0 : i32
    %c0_i32_0 = arith.constant 0 : i32
    return %arg0, %c0_i32 : i32, i32
  }
  func.func @transform_1(%arg0: i32) -> (i32, i32) {
    %c0_i32 = arith.constant 0 : i32
    %c0_i32_0 = arith.constant 0 : i32
    %c0_i32_1 = arith.constant 0 : i32
    return %c0_i32, %c0_i32_0 : i32, i32
  }
  func.func @transform_2(%arg0: i32) -> (i32, i32) {
    %c0_i32 = arith.constant 0 : i32
    %c0_i32_0 = arith.constant 0 : i32
    %c0_i32_1 = arith.constant 0 : i32
    return %c0_i32, %c0_i32_0 : i32, i32
  }
  func.func @transform_3(%arg0: i32) -> (i32, i32) {
    %c0_i32 = arith.constant 0 : i32
    %c0_i32_0 = arith.constant 0 : i32
    %c0_i32_1 = arith.constant 0 : i32
    return %c0_i32, %c0_i32_0 : i32, i32
  }
  func.func @transform_4(%arg0: i32) -> (i32, i32) {
    %c0_i32 = arith.constant 0 : i32
    %c0_i32_0 = arith.constant 0 : i32
    %c0_i32_1 = arith.constant 0 : i32
    return %c0_i32, %c0_i32_0 : i32, i32
  }
  func.func @transform_5(%arg0: i32) -> (i32, i32) {
    %c0_i32 = arith.constant 0 : i32
    %c0_i32_0 = arith.constant 0 : i32
    return %arg0, %c0_i32 : i32, i32
  }
}

</mosaic_0001>

<llo_original>
// kernel: tpu_custom_call.1
$region0: #{tpu_custom_call.1}
  #allocation0 [shape = 'u32[]', space=smem, size = 0x4, offset = 0x4, fixed_abs, tag = 'smem constant byte address 0x4 - core index']
  #allocation1 [shape = 'u32[144,128]{1,0:T(1,128)}', space=vmem, size = 0x12000, scoped, tag = 'internal scratch']
  %s0 = inlined_call_operand.hbm [shape: bf16[16,768], index: 0, kind: input, shape index: {}]
  %s1 = inlined_call_operand.hbm [shape: bf16[768,512], index: 1, kind: input, shape index: {}]
  %s2 = inlined_call_operand.hbm [shape: f32[1,512], index: 2, kind: input, shape index: {}]
  %s3 = inlined_call_operand.hbm [shape: bf16[512,128], index: 3, kind: input, shape index: {}]
  %s4 = inlined_call_operand.vmem [shape: f32[1,128], index: 4, kind: input, shape index: {}]
  %s5 = inlined_call_operand.hbm [shape: f32[16,128], index: 5, kind: output, shape index: {}]
  %s6 = sld [smem:[#allocation0]]
  $region46: #{tpu_custom_call.1} parent=0
    _
  %s8 = ssub.s32 1, %s6
  %s9 = scalar_select 0, %s8, %s6
  $region1: #{tpu_custom_call.1} parent=0
    #allocation2 [shape = 'u8[24576]{0}', space=vmem, size = 0x6000, scoped, tag = 'input window, operand 0, single buffered']
    #allocation3 [shape = 's32[1]{0}', space=sflag, size = 0x4, scoped, tag = 'scoped memory for tpu_custom_call.1']
    #allocation4 [shape = 's32[1]{0}', space=sflag, size = 0x4, scoped, tag = 'scoped memory for tpu_custom_call.1']
    #allocation5 [shape = 'u8[786432]{0}', space=vmem, size = 0xc0000, scoped, tag = 'input window, operand 1, single buffered']
    #allocation6 [shape = 's32[1]{0}', space=sflag, size = 0x4, scoped, tag = 'scoped memory for tpu_custom_call.1']
    #allocation7 [shape = 'u8[2048]{0}', space=vmem, size = 0x800, scoped, tag = 'input window, operand 2, single buffered']
    #allocation8 [shape = 'u8[131072]{0}', space=vmem, size = 0x20000, scoped, tag = 'input window, operand 3, single buffered']
    #allocation9 [shape = 's32[1]{0}', space=sflag, size = 0x4, scoped, tag = 'scoped memory for tpu_custom_call.1']
    #allocation10 [shape = 'u8[8192]{0}', space=vmem, size = 0x2000, scoped, tag = 'output window, operand 0, single buffered']
    %10 = vsyncpa [#allocation3], 0
    %11 = vsyncpa [#allocation6], 0
    %12 = vsyncpa [#allocation9], 0
    %13 = vsyncpa [#allocation4], 0
    // Predicated region
    $region2: #{tpu_custom_call.1} parent=1 // pred_check
      _
    $region3: #{tpu_custom_call.1} parent=1 // pred_check_branch
      %15 = sbr.rel (0) target = $region5
    $region4: #{tpu_custom_call.1} parent=1 // pred_region
      %s17 = ssub.s32 768, 768
      %18 = vsyncadd [#allocation3], %s17
      %s19 = sshll.u32 [#allocation2], 4
      %s20 = int_to_ptr.vmem [resolvable:$true] %s19
      %25 = dma.hbm_to_vmem [thread:$0]  %s0, 768, %s20, [#allocation3], 384, 384, 24
    $region5: #{tpu_custom_call.1} parent=1 // pred_fallthru
      _
    // Predicated region
    $region6: #{tpu_custom_call.1} parent=1 // pred_check
      _
    $region7: #{tpu_custom_call.1} parent=1 // pred_check_branch
      %27 = sbr.rel (0) target = $region9
    $region8: #{tpu_custom_call.1} parent=1 // pred_region
      %s29 = ssub.s32 24576, 24576
      %30 = vsyncadd [#allocation6], %s29
      %s31 = sshll.u32 [#allocation5], 4
      %s32 = int_to_ptr.vmem [resolvable:$true] %s31
      %37 = dma.hbm_to_vmem [thread:$0]  %s1, 24576, %s32, [#allocation6], 256, 256, 16
    $region9: #{tpu_custom_call.1} parent=1 // pred_fallthru
      _
    // Predicated region
    $region10: #{tpu_custom_call.1} parent=1 // pred_check
      _
    $region11: #{tpu_custom_call.1} parent=1 // pred_check_branch
      %39 = sbr.rel (0) target = $region13
    $region12: #{tpu_custom_call.1} parent=1 // pred_region
      %s41 = ssub.s32 64, 64
      %42 = vsyncadd [#allocation6], %s41
      %s44 = sshll.u32 [#allocation7], 4
      %s45 = int_to_ptr.vmem [resolvable:$true] %s44
      %47 = dma.hbm_to_vmem [thread:$0]  %s2, 64, %s45, [#allocation6]
    $region13: #{tpu_custom_call.1} parent=1 // pred_fallthru
      _
    // Predicated region
    $region14: #{tpu_custom_call.1} parent=1 // pred_check
      _
    $region15: #{tpu_custom_call.1} parent=1 // pred_check_branch
      %49 = sbr.rel (0) target = $region17
    $region16: #{tpu_custom_call.1} parent=1 // pred_region
      %s51 = ssub.s32 4096, 4096
      %52 = vsyncadd [#allocation9], %s51
      %s53 = sshll.u32 [#allocation8], 4
      %s54 = int_to_ptr.vmem [resolvable:$true] %s53
      %59 = dma.hbm_to_vmem [thread:$0]  %s3, 4096, %s54, [#allocation9], 64, 64, 4
    $region17: #{tpu_custom_call.1} parent=1 // pred_fallthru
      _
    // Predicated region
    $region18: #{tpu_custom_call.1} parent=1 // pred_check
      _
    $region19: #{tpu_custom_call.1} parent=1 // pred_check_branch
      %61 = sbr.rel (0) target = $region21
    $region20: #{tpu_custom_call.1} parent=1 // pred_region
      _
    $region21: #{tpu_custom_call.1} parent=1 // pred_fallthru
      _
    // Predicated region
    $region22: #{tpu_custom_call.1} parent=1 // pred_check
      _
    $region23: #{tpu_custom_call.1} parent=1 // pred_check_branch
      %63 = sbr.rel (0) target = $region25
    $region24: #{tpu_custom_call.1} parent=1 // pred_region
      %64 = dma.done [#allocation3], 768
    $region25: #{tpu_custom_call.1} parent=1 // pred_fallthru
      _
    // Predicated region
    $region26: #{tpu_custom_call.1} parent=1 // pred_check
      _
    $region27: #{tpu_custom_call.1} parent=1 // pred_check_branch
      %66 = sbr.rel (0) target = $region29
    $region28: #{tpu_custom_call.1} parent=1 // pred_region
      %67 = dma.done [#allocation6], 24576
    $region29: #{tpu_custom_call.1} parent=1 // pred_fallthru
      _
    // Predicated region
    $region30: #{tpu_custom_call.1} parent=1 // pred_check
      _
    $region31: #{tpu_custom_call.1} parent=1 // pred_check_branch
      %69 = sbr.rel (0) target = $region33
    $region32: #{tpu_custom_call.1} parent=1 // pred_region
      %70 = dma.done [#allocation6], 64
    $region33: #{tpu_custom_call.1} parent=1 // pred_fallthru
      _
    // Predicated region
    $region34: #{tpu_custom_call.1} parent=1 // pred_check
      _
    $region35: #{tpu_custom_call.1} parent=1 // pred_check_branch
      %72 = sbr.rel (0) target = $region37
    $region36: #{tpu_custom_call.1} parent=1 // pred_region
      %73 = dma.done [#allocation9], 4096
    $region37: #{tpu_custom_call.1} parent=1 // pred_fallthru
      _
    %v75 = vld [vmem:[#allocation2] sm:$0xff]
    %v76 = vld [vmem:[#allocation2 + $0x8] sm:$0xff]
    %v77 = vld [vmem:[#allocation2 + $0x10] sm:$0xff]
    %v78 = vld [vmem:[#allocation2 + $0x18] sm:$0xff]
    %v79 = vld [vmem:[#allocation2 + $0x20] sm:$0xff]
    %v80 = vld [vmem:[#allocation2 + $0x28] sm:$0xff]
    %v81 = vld [vmem:[#allocation5] sm:$0xff]
    %v82 = vld [vmem:[#allocation5 + $0x8] sm:$0xff]
    %v83 = vld [vmem:[#allocation5 + $0x10] sm:$0xff]
    %v84 = vld [vmem:[#allocation5 + $0x18] sm:$0xff]
    %v85 = vld [vmem:[#allocation5 + $0x20] sm:$0xff]
    %v86 = vld [vmem:[#allocation5 + $0x28] sm:$0xff]
    %v87 = vld [vmem:[#allocation5 + $0x30] sm:$0xff]
    %v88 = vld [vmem:[#allocation5 + $0x38] sm:$0xff]
    %v89 = vld [vmem:[#allocation5 + $0x40] sm:$0xff]
    %v90 = vld [vmem:[#allocation5 + $0x48] sm:$0xff]
    %v91 = vld [vmem:[#allocation5 + $0x50] sm:$0xff]
    %v92 = vld [vmem:[#allocation5 + $0x58] sm:$0xff]
    %v93 = vld [vmem:[#allocation5 + $0x60] sm:$0xff]
    %v94 = vld [vmem:[#allocation5 + $0x68] sm:$0xff]
    %v95 = vld [vmem:[#allocation5 + $0x70] sm:$0xff]
    %v96 = vld [vmem:[#allocation5 + $0x78] sm:$0xff]
    %v97 = vld [vmem:[#allocation5 + $0x80] sm:$0xff]
    %v98 = vld [vmem:[#allocation5 + $0x88] sm:$0xff]
    %v99 = vld [vmem:[#allocation5 + $0x90] sm:$0xff]
    %v100 = vld [vmem:[#allocation5 + $0x98] sm:$0xff]
    %v101 = vld [vmem:[#allocation5 + $0xa0] sm:$0xff]
    %v102 = vld [vmem:[#allocation5 + $0xa8] sm:$0xff]
    %v103 = vld [vmem:[#allocation5 + $0xb0] sm:$0xff]
    %v104 = vld [vmem:[#allocation5 + $0xb8] sm:$0xff]
    %v105 = vld [vmem:[#allocation5 + $0xc0] sm:$0xff]
    %v106 = vld [vmem:[#allocation5 + $0xc8] sm:$0xff]
    %v107 = vld [vmem:[#allocation5 + $0xd0] sm:$0xff]
    %v108 = vld [vmem:[#allocation5 + $0xd8] sm:$0xff]
    %v109 = vld [vmem:[#allocation5 + $0xe0] sm:$0xff]
    %v110 = vld [vmem:[#allocation5 + $0xe8] sm:$0xff]
    %v111 = vld [vmem:[#allocation5 + $0xf0] sm:$0xff]
    %v112 = vld [vmem:[#allocation5 + $0xf8] sm:$0xff]
    %v113 = vld [vmem:[#allocation5 + $0x100] sm:$0xff]
    %v114 = vld [vmem:[#allocation5 + $0x108] sm:$0xff]
    %v115 = vld [vmem:[#allocation5 + $0x110] sm:$0xff]
    %v116 = vld [vmem:[#allocation5 + $0x118] sm:$0xff]
    %v117 = vld [vmem:[#allocation5 + $0x120] sm:$0xff]
    %v118 = vld [vmem:[#allocation5 + $0x128] sm:$0xff]
    %v119 = vld [vmem:[#allocation5 + $0x130] sm:$0xff]
    %v120 = vld [vmem:[#allocation5 + $0x138] sm:$0xff]
    %v121 = vld [vmem:[#allocation5 + $0x140] sm:$0xff]
    %v122 = vld [vmem:[#allocation5 + $0x148] sm:$0xff]
    %v123 = vld [vmem:[#allocation5 + $0x150] sm:$0xff]
    %v124 = vld [vmem:[#allocation5 + $0x158] sm:$0xff]
    %v125 = vld [vmem:[#allocation5 + $0x160] sm:$0xff]
    %v126 = vld [vmem:[#allocation5 + $0x168] sm:$0xff]
    %v127 = vld [vmem:[#allocation5 + $0x170] sm:$0xff]
    %v128 = vld [vmem:[#allocation5 + $0x178] sm:$0xff]
    %v129 = vld [vmem:[#allocation5 + $0x180] sm:$0xff]
    %v130 = vld [vmem:[#allocation5 + $0x188] sm:$0xff]
    %v131 = vld [vmem:[#allocation5 + $0x190] sm:$0xff]
    %v132 = vld [vmem:[#allocation5 + $0x198] sm:$0xff]
    %v133 = vld [vmem:[#allocation5 + $0x1a0] sm:$0xff]
    %v134 = vld [vmem:[#allocation5 + $0x1a8] sm:$0xff]
    %v135 = vld [vmem:[#allocation5 + $0x1b0] sm:$0xff]
    %v136 = vld [vmem:[#allocation5 + $0x1b8] sm:$0xff]
    %v137 = vld [vmem:[#allocation5 + $0x1c0] sm:$0xff]
    %v138 = vld [vmem:[#allocation5 + $0x1c8] sm:$0xff]
    %v139 = vld [vmem:[#allocation5 + $0x1d0] sm:$0xff]
    %v140 = vld [vmem:[#allocation5 + $0x1d8] sm:$0xff]
    %v141 = vld [vmem:[#allocation5 + $0x1e0] sm:$0xff]
    %v142 = vld [vmem:[#allocation5 + $0x1e8] sm:$0xff]
    %v143 = vld [vmem:[#allocation5 + $0x1f0] sm:$0xff]
    %v144 = vld [vmem:[#allocation5 + $0x1f8] sm:$0xff]
    %v145 = vld [vmem:[#allocation5 + $0x200] sm:$0xff]
    %v146 = vld [vmem:[#allocation5 + $0x208] sm:$0xff]
    %v147 = vld [vmem:[#allocation5 + $0x210] sm:$0xff]
    %v148 = vld [vmem:[#allocation5 + $0x218] sm:$0xff]
    %v149 = vld [vmem:[#allocation5 + $0x220] sm:$0xff]
    %v150 = vld [vmem:[#allocation5 + $0x228] sm:$0xff]
    %v151 = vld [vmem:[#allocation5 + $0x230] sm:$0xff]
    %v152 = vld [vmem:[#allocation5 + $0x238] sm:$0xff]
    %v153 = vld [vmem:[#allocation5 + $0x240] sm:$0xff]
    %v154 = vld [vmem:[#allocation5 + $0x248] sm:$0xff]
    %v155 = vld [vmem:[#allocation5 + $0x250] sm:$0xff]
    %v156 = vld [vmem:[#allocation5 + $0x258] sm:$0xff]
    %v157 = vld [vmem:[#allocation5 + $0x260] sm:$0xff]
    %v158 = vld [vmem:[#allocation5 + $0x268] sm:$0xff]
    %v159 = vld [vmem:[#allocation5 + $0x270] sm:$0xff]
    %v160 = vld [vmem:[#allocation5 + $0x278] sm:$0xff]
    %v161 = vld [vmem:[#allocation5 + $0x280] sm:$0xff]
    %v162 = vld [vmem:[#allocation5 + $0x288] sm:$0xff]
    %v163 = vld [vmem:[#allocation5 + $0x290] sm:$0xff]
    %v164 = vld [vmem:[#allocation5 + $0x298] sm:$0xff]
    %v165 = vld [vmem:[#allocation5 + $0x2a0] sm:$0xff]
    %v166 = vld [vmem:[#allocation5 + $0x2a8] sm:$0xff]
    %v167 = vld [vmem:[#allocation5 + $0x2b0] sm:$0xff]
    %v168 = vld [vmem:[#allocation5 + $0x2b8] sm:$0xff]
    %v169 = vld [vmem:[#allocation5 + $0x2c0] sm:$0xff]
    %v170 = vld [vmem:[#allocation5 + $0x2c8] sm:$0xff]
    %v171 = vld [vmem:[#allocation5 + $0x2d0] sm:$0xff]
    %v172 = vld [vmem:[#allocation5 + $0x2d8] sm:$0xff]
    %v173 = vld [vmem:[#allocation5 + $0x2e0] sm:$0xff]
    %v174 = vld [vmem:[#allocation5 + $0x2e8] sm:$0xff]
    %v175 = vld [vmem:[#allocation5 + $0x2f0] sm:$0xff]
    %v176 = vld [vmem:[#allocation5 + $0x2f8] sm:$0xff]
    %v177 = vld [vmem:[#allocation5 + $0x300] sm:$0xff]
    %v178 = vld [vmem:[#allocation5 + $0x308] sm:$0xff]
    %v179 = vld [vmem:[#allocation5 + $0x310] sm:$0xff]
    %v180 = vld [vmem:[#allocation5 + $0x318] sm:$0xff]
    %v181 = vld [vmem:[#allocation5 + $0x320] sm:$0xff]
    %v182 = vld [vmem:[#allocation5 + $0x328] sm:$0xff]
    %v183 = vld [vmem:[#allocation5 + $0x330] sm:$0xff]
    %v184 = vld [vmem:[#allocation5 + $0x338] sm:$0xff]
    %v185 = vld [vmem:[#allocation5 + $0x340] sm:$0xff]
    %v186 = vld [vmem:[#allocation5 + $0x348] sm:$0xff]
    %v187 = vld [vmem:[#allocation5 + $0x350] sm:$0xff]
    %v188 = vld [vmem:[#allocation5 + $0x358] sm:$0xff]
    %v189 = vld [vmem:[#allocation5 + $0x360] sm:$0xff]
    %v190 = vld [vmem:[#allocation5 + $0x368] sm:$0xff]
    %v191 = vld [vmem:[#allocation5 + $0x370] sm:$0xff]
    %v192 = vld [vmem:[#allocation5 + $0x378] sm:$0xff]
    %v193 = vld [vmem:[#allocation5 + $0x380] sm:$0xff]
    %v194 = vld [vmem:[#allocation5 + $0x388] sm:$0xff]
    %v195 = vld [vmem:[#allocation5 + $0x390] sm:$0xff]
    %v196 = vld [vmem:[#allocation5 + $0x398] sm:$0xff]
    %v197 = vld [vmem:[#allocation5 + $0x3a0] sm:$0xff]
    %v198 = vld [vmem:[#allocation5 + $0x3a8] sm:$0xff]
    %v199 = vld [vmem:[#allocation5 + $0x3b0] sm:$0xff]
    %v200 = vld [vmem:[#allocation5 + $0x3b8] sm:$0xff]
    %v201 = vld [vmem:[#allocation5 + $0x3c0] sm:$0xff]
    %v202 = vld [vmem:[#allocation5 + $0x3c8] sm:$0xff]
    %v203 = vld [vmem:[#allocation5 + $0x3d0] sm:$0xff]
    %v204 = vld [vmem:[#allocation5 + $0x3d8] sm:$0xff]
    %v205 = vld [vmem:[#allocation5 + $0x3e0] sm:$0xff]
    %v206 = vld [vmem:[#allocation5 + $0x3e8] sm:$0xff]
    %v207 = vld [vmem:[#allocation5 + $0x3f0] sm:$0xff]
    %v208 = vld [vmem:[#allocation5 + $0x3f8] sm:$0xff]
    %v209 = vld [vmem:[#allocation5 + $0x400] sm:$0xff]
    %v210 = vld [vmem:[#allocation5 + $0x408] sm:$0xff]
    %v211 = vld [vmem:[#allocation5 + $0x410] sm:$0xff]
    %v212 = vld [vmem:[#allocation5 + $0x418] sm:$0xff]
    %v213 = vld [vmem:[#allocation5 + $0x420] sm:$0xff]
    %v214 = vld [vmem:[#allocation5 + $0x428] sm:$0xff]
    %v215 = vld [vmem:[#allocation5 + $0x430] sm:$0xff]
    %v216 = vld [vmem:[#allocation5 + $0x438] sm:$0xff]
    %v217 = vld [vmem:[#allocation5 + $0x440] sm:$0xff]
    %v218 = vld [vmem:[#allocation5 + $0x448] sm:$0xff]
    %v219 = vld [vmem:[#allocation5 + $0x450] sm:$0xff]
    %v220 = vld [vmem:[#allocation5 + $0x458] sm:$0xff]
    %v221 = vld [vmem:[#allocation5 + $0x460] sm:$0xff]
    %v222 = vld [vmem:[#allocation5 + $0x468] sm:$0xff]
    %v223 = vld [vmem:[#allocation5 + $0x470] sm:$0xff]
    %v224 = vld [vmem:[#allocation5 + $0x478] sm:$0xff]
    %v225 = vld [vmem:[#allocation5 + $0x480] sm:$0xff]
    %v226 = vld [vmem:[#allocation5 + $0x488] sm:$0xff]
    %v227 = vld [vmem:[#allocation5 + $0x490] sm:$0xff]
    %v228 = vld [vmem:[#allocation5 + $0x498] sm:$0xff]
    %v229 = vld [vmem:[#allocation5 + $0x4a0] sm:$0xff]
    %v230 = vld [vmem:[#allocation5 + $0x4a8] sm:$0xff]
    %v231 = vld [vmem:[#allocation5 + $0x4b0] sm:$0xff]
    %v232 = vld [vmem:[#allocation5 + $0x4b8] sm:$0xff]
    %v233 = vld [vmem:[#allocation5 + $0x4c0] sm:$0xff]
    %v234 = vld [vmem:[#allocation5 + $0x4c8] sm:$0xff]
    %v235 = vld [vmem:[#allocation5 + $0x4d0] sm:$0xff]
    %v236 = vld [vmem:[#allocation5 + $0x4d8] sm:$0xff]
    %v237 = vld [vmem:[#allocation5 + $0x4e0] sm:$0xff]
    %v238 = vld [vmem:[#allocation5 + $0x4e8] sm:$0xff]
    %v239 = vld [vmem:[#allocation5 + $0x4f0] sm:$0xff]
    %v240 = vld [vmem:[#allocation5 + $0x4f8] sm:$0xff]
    %v241 = vld [vmem:[#allocation5 + $0x500] sm:$0xff]
    %v242 = vld [vmem:[#allocation5 + $0x508] sm:$0xff]
    %v243 = vld [vmem:[#allocation5 + $0x510] sm:$0xff]
    %v244 = vld [vmem:[#allocation5 + $0x518] sm:$0xff]
    %v245 = vld [vmem:[#allocation5 + $0x520] sm:$0xff]
    %v246 = vld [vmem:[#allocation5 + $0x528] sm:$0xff]
    %v247 = vld [vmem:[#allocation5 + $0x530] sm:$0xff]
    %v248 = vld [vmem:[#allocation5 + $0x538] sm:$0xff]
    %v249 = vld [vmem:[#allocation5 + $0x540] sm:$0xff]
    %v250 = vld [vmem:[#allocation5 + $0x548] sm:$0xff]
    %v251 = vld [vmem:[#allocation5 + $0x550] sm:$0xff]
    %v252 = vld [vmem:[#allocation5 + $0x558] sm:$0xff]
    %v253 = vld [vmem:[#allocation5 + $0x560] sm:$0xff]
    %v254 = vld [vmem:[#allocation5 + $0x568] sm:$0xff]
    %v255 = vld [vmem:[#allocation5 + $0x570] sm:$0xff]
    %v256 = vld [vmem:[#allocation5 + $0x578] sm:$0xff]
    %v257 = vld [vmem:[#allocation5 + $0x580] sm:$0xff]
    %v258 = vld [vmem:[#allocation5 + $0x588] sm:$0xff]
    %v259 = vld [vmem:[#allocation5 + $0x590] sm:$0xff]
    %v260 = vld [vmem:[#allocation5 + $0x598] sm:$0xff]
    %v261 = vld [vmem:[#allocation5 + $0x5a0] sm:$0xff]
    %v262 = vld [vmem:[#allocation5 + $0x5a8] sm:$0xff]
    %v263 = vld [vmem:[#allocation5 + $0x5b0] sm:$0xff]
    %v264 = vld [vmem:[#allocation5 + $0x5b8] sm:$0xff]
    %v265 = vld [vmem:[#allocation5 + $0x5c0] sm:$0xff]
    %v266 = vld [vmem:[#allocation5 + $0x5c8] sm:$0xff]
    %v267 = vld [vmem:[#allocation5 + $0x5d0] sm:$0xff]
    %v268 = vld [vmem:[#allocation5 + $0x5d8] sm:$0xff]
    %v269 = vld [vmem:[#allocation5 + $0x5e0] sm:$0xff]
    %v270 = vld [vmem:[#allocation5 + $0x5e8] sm:$0xff]
    %v271 = vld [vmem:[#allocation5 + $0x5f0] sm:$0xff]
    %v272 = vld [vmem:[#allocation5 + $0x5f8] sm:$0xff]
    %v273 = vld [vmem:[#allocation7] sm:$0xf]
    %v275 = vlaneseq
    %v276 = vshrl.u32 %v275, 7
    %v277 = vsub.s32 0, %v276
    %v278 = vrot.slane %v273, %v277
    %v279 = vlaneseq
    %v280 = vshrl.u32 %v279, 7
    %v281 = vsub.s32 1, %v280
    %v282 = vrot.slane %v273, %v281
    %v283 = vlaneseq
    %v284 = vshrl.u32 %v283, 7
    %v285 = vsub.s32 2, %v284
    %v286 = vrot.slane %v273, %v285
    %v287 = vlaneseq
    %v288 = vshrl.u32 %v287, 7
    %v289 = vsub.s32 3, %v288
    %v290 = vrot.slane %v273, %v289
    %v301 = vunpack.c.l.b16 %v75
    %v302 = vunpack.c.h.b16 %v75
    %v303 = vunpack.c.l.b16 %v76
    %v304 = vunpack.c.h.b16 %v76
    %v305 = vunpack.c.l.b16 %v77
    %v306 = vunpack.c.h.b16 %v77
    %v307 = vunpack.c.l.b16 %v78
    %v308 = vunpack.c.h.b16 %v78
    %v309 = vunpack.c.l.b16 %v79
    %v310 = vunpack.c.h.b16 %v79
    %v311 = vunpack.c.l.b16 %v80
    %v312 = vunpack.c.h.b16 %v80
    %v313 = vpack.c.b16 %v307, %v301
    %v314 = vpack.c.b16 %v308, %v302
    %v315 = vpack.c.b16 %v309, %v303
    %v316 = vpack.c.b16 %v310, %v304
    %v317 = vpack.c.b16 %v311, %v305
    %v318 = vpack.c.b16 %v312, %v306
    %v517 = vunpack.c.l.b16 %v81
    %v518 = vunpack.c.h.b16 %v81
    %v519 = vunpack.c.l.b16 %v82
    %v520 = vunpack.c.h.b16 %v82
    %v521 = vunpack.c.l.b16 %v83
    %v522 = vunpack.c.h.b16 %v83
    %v523 = vunpack.c.l.b16 %v84
    %v524 = vunpack.c.h.b16 %v84
    %v525 = vunpack.c.l.b16 %v85
    %v526 = vunpack.c.h.b16 %v85
    %v527 = vunpack.c.l.b16 %v86
    %v528 = vunpack.c.h.b16 %v86
    %v529 = vunpack.c.l.b16 %v87
    %v530 = vunpack.c.h.b16 %v87
    %v531 = vunpack.c.l.b16 %v88
    %v532 = vunpack.c.h.b16 %v88
    %v533 = vunpack.c.l.b16 %v89
    %v534 = vunpack.c.h.b16 %v89
    %v535 = vunpack.c.l.b16 %v90
    %v536 = vunpack.c.h.b16 %v90
    %v537 = vunpack.c.l.b16 %v91
    %v538 = vunpack.c.h.b16 %v91
    %v539 = vunpack.c.l.b16 %v92
    %v540 = vunpack.c.h.b16 %v92
    %v541 = vunpack.c.l.b16 %v93
    %v542 = vunpack.c.h.b16 %v93
    %v543 = vunpack.c.l.b16 %v94
    %v544 = vunpack.c.h.b16 %v94
    %v545 = vunpack.c.l.b16 %v95
    %v546 = vunpack.c.h.b16 %v95
    %v547 = vunpack.c.l.b16 %v96
    %v548 = vunpack.c.h.b16 %v96
    %v549 = vunpack.c.l.b16 %v97
    %v550 = vunpack.c.h.b16 %v97
    %v551 = vunpack.c.l.b16 %v98
    %v552 = vunpack.c.h.b16 %v98
    %v553 = vunpack.c.l.b16 %v99
    %v554 = vunpack.c.h.b16 %v99
    %v555 = vunpack.c.l.b16 %v100
    %v556 = vunpack.c.h.b16 %v100
    %v557 = vunpack.c.l.b16 %v101
    %v558 = vunpack.c.h.b16 %v101
    %v559 = vunpack.c.l.b16 %v102
    %v560 = vunpack.c.h.b16 %v102
    %v561 = vunpack.c.l.b16 %v103
    %v562 = vunpack.c.h.b16 %v103
    %v563 = vunpack.c.l.b16 %v104
    %v564 = vunpack.c.h.b16 %v104
    %v565 = vunpack.c.l.b16 %v105
    %v566 = vunpack.c.h.b16 %v105
    %v567 = vunpack.c.l.b16 %v106
    %v568 = vunpack.c.h.b16 %v106
    %v569 = vunpack.c.l.b16 %v107
    %v570 = vunpack.c.h.b16 %v107
    %v571 = vunpack.c.l.b16 %v108
    %v572 = vunpack.c.h.b16 %v108
    %v573 = vunpack.c.l.b16 %v109
    %v574 = vunpack.c.h.b16 %v109
    %v575 = vunpack.c.l.b16 %v110
    %v576 = vunpack.c.h.b16 %v110
    %v577 = vunpack.c.l.b16 %v111
    %v578 = vunpack.c.h.b16 %v111
    %v579 = vunpack.c.l.b16 %v112
    %v580 = vunpack.c.h.b16 %v112
    %v581 = vunpack.c.l.b16 %v113
    %v582 = vunpack.c.h.b16 %v113
    %v583 = vunpack.c.l.b16 %v114
    %v584 = vunpack.c.h.b16 %v114
    %v585 = vunpack.c.l.b16 %v115
    %v586 = vunpack.c.h.b16 %v115
    %v587 = vunpack.c.l.b16 %v116
    %v588 = vunpack.c.h.b16 %v116
    %v589 = vunpack.c.l.b16 %v117
    %v590 = vunpack.c.h.b16 %v117
    %v591 = vunpack.c.l.b16 %v118
    %v592 = vunpack.c.h.b16 %v118
    %v593 = vunpack.c.l.b16 %v119
    %v594 = vunpack.c.h.b16 %v119
    %v595 = vunpack.c.l.b16 %v120
    %v596 = vunpack.c.h.b16 %v120
    %v597 = vunpack.c.l.b16 %v121
    %v598 = vunpack.c.h.b16 %v121
    %v599 = vunpack.c.l.b16 %v122
    %v600 = vunpack.c.h.b16 %v122
    %v601 = vunpack.c.l.b16 %v123
    %v602 = vunpack.c.h.b16 %v123
    %v603 = vunpack.c.l.b16 %v124
    %v604 = vunpack.c.h.b16 %v124
    %v605 = vunpack.c.l.b16 %v125
    %v606 = vunpack.c.h.b16 %v125
    %v607 = vunpack.c.l.b16 %v126
    %v608 = vunpack.c.h.b16 %v126
    %v609 = vunpack.c.l.b16 %v127
    %v610 = vunpack.c.h.b16 %v127
    %v611 = vunpack.c.l.b16 %v128
    %v612 = vunpack.c.h.b16 %v128
    %v613 = vunpack.c.l.b16 %v129
    %v614 = vunpack.c.h.b16 %v129
    %v615 = vunpack.c.l.b16 %v130
    %v616 = vunpack.c.h.b16 %v130
    %v617 = vunpack.c.l.b16 %v131
    %v618 = vunpack.c.h.b16 %v131
    %v619 = vunpack.c.l.b16 %v132
    %v620 = vunpack.c.h.b16 %v132
    %v621 = vunpack.c.l.b16 %v133
    %v622 = vunpack.c.h.b16 %v133
    %v623 = vunpack.c.l.b16 %v134
    %v624 = vunpack.c.h.b16 %v134
    %v625 = vunpack.c.l.b16 %v135
    %v626 = vunpack.c.h.b16 %v135
    %v627 = vunpack.c.l.b16 %v136
    %v628 = vunpack.c.h.b16 %v136
    %v629 = vunpack.c.l.b16 %v137
    %v630 = vunpack.c.h.b16 %v137
    %v631 = vunpack.c.l.b16 %v138
    %v632 = vunpack.c.h.b16 %v138
    %v633 = vunpack.c.l.b16 %v139
    %v634 = vunpack.c.h.b16 %v139
    %v635 = vunpack.c.l.b16 %v140
    %v636 = vunpack.c.h.b16 %v140
    %v637 = vunpack.c.l.b16 %v141
    %v638 = vunpack.c.h.b16 %v141
    %v639 = vunpack.c.l.b16 %v142
    %v640 = vunpack.c.h.b16 %v142
    %v641 = vunpack.c.l.b16 %v143
    %v642 = vunpack.c.h.b16 %v143
    %v643 = vunpack.c.l.b16 %v144
    %v644 = vunpack.c.h.b16 %v144
    %v645 = vunpack.c.l.b16 %v145
    %v646 = vunpack.c.h.b16 %v145
    %v647 = vunpack.c.l.b16 %v146
    %v648 = vunpack.c.h.b16 %v146
    %v649 = vunpack.c.l.b16 %v147
    %v650 = vunpack.c.h.b16 %v147
    %v651 = vunpack.c.l.b16 %v148
    %v652 = vunpack.c.h.b16 %v148
    %v653 = vunpack.c.l.b16 %v149
    %v654 = vunpack.c.h.b16 %v149
    %v655 = vunpack.c.l.b16 %v150
    %v656 = vunpack.c.h.b16 %v150
    %v657 = vunpack.c.l.b16 %v151
    %v658 = vunpack.c.h.b16 %v151
    %v659 = vunpack.c.l.b16 %v152
    %v660 = vunpack.c.h.b16 %v152
    %v661 = vunpack.c.l.b16 %v153
    %v662 = vunpack.c.h.b16 %v153
    %v663 = vunpack.c.l.b16 %v154
    %v664 = vunpack.c.h.b16 %v154
    %v665 = vunpack.c.l.b16 %v155
    %v666 = vunpack.c.h.b16 %v155
    %v667 = vunpack.c.l.b16 %v156
    %v668 = vunpack.c.h.b16 %v156
    %v669 = vunpack.c.l.b16 %v157
    %v670 = vunpack.c.h.b16 %v157
    %v671 = vunpack.c.l.b16 %v158
    %v672 = vunpack.c.h.b16 %v158
    %v673 = vunpack.c.l.b16 %v159
    %v674 = vunpack.c.h.b16 %v159
    %v675 = vunpack.c.l.b16 %v160
    %v676 = vunpack.c.h.b16 %v160
    %v677 = vunpack.c.l.b16 %v161
    %v678 = vunpack.c.h.b16 %v161
    %v679 = vunpack.c.l.b16 %v162
    %v680 = vunpack.c.h.b16 %v162
    %v681 = vunpack.c.l.b16 %v163
    %v682 = vunpack.c.h.b16 %v163
    %v683 = vunpack.c.l.b16 %v164
    %v684 = vunpack.c.h.b16 %v164
    %v685 = vunpack.c.l.b16 %v165
    %v686 = vunpack.c.h.b16 %v165
    %v687 = vunpack.c.l.b16 %v166
    %v688 = vunpack.c.h.b16 %v166
    %v689 = vunpack.c.l.b16 %v167
    %v690 = vunpack.c.h.b16 %v167
    %v691 = vunpack.c.l.b16 %v168
    %v692 = vunpack.c.h.b16 %v168
    %v693 = vunpack.c.l.b16 %v169
    %v694 = vunpack.c.h.b16 %v169
    %v695 = vunpack.c.l.b16 %v170
    %v696 = vunpack.c.h.b16 %v170
    %v697 = vunpack.c.l.b16 %v171
    %v698 = vunpack.c.h.b16 %v171
    %v699 = vunpack.c.l.b16 %v172
    %v700 = vunpack.c.h.b16 %v172
    %v701 = vunpack.c.l.b16 %v173
    %v702 = vunpack.c.h.b16 %v173
    %v703 = vunpack.c.l.b16 %v174
    %v704 = vunpack.c.h.b16 %v174
    %v705 = vunpack.c.l.b16 %v175
    %v706 = vunpack.c.h.b16 %v175
    %v707 = vunpack.c.l.b16 %v176
    %v708 = vunpack.c.h.b16 %v176
    %v709 = vunpack.c.l.b16 %v177
    %v710 = vunpack.c.h.b16 %v177
    %v711 = vunpack.c.l.b16 %v178
    %v712 = vunpack.c.h.b16 %v178
    %v713 = vunpack.c.l.b16 %v179
    %v714 = vunpack.c.h.b16 %v179
    %v715 = vunpack.c.l.b16 %v180
    %v716 = vunpack.c.h.b16 %v180
    %v717 = vunpack.c.l.b16 %v181
    %v718 = vunpack.c.h.b16 %v181
    %v719 = vunpack.c.l.b16 %v182
    %v720 = vunpack.c.h.b16 %v182
    %v721 = vunpack.c.l.b16 %v183
    %v722 = vunpack.c.h.b16 %v183
    %v723 = vunpack.c.l.b16 %v184
    %v724 = vunpack.c.h.b16 %v184
    %v725 = vunpack.c.l.b16 %v185
    %v726 = vunpack.c.h.b16 %v185
    %v727 = vunpack.c.l.b16 %v186
    %v728 = vunpack.c.h.b16 %v186
    %v729 = vunpack.c.l.b16 %v187
    %v730 = vunpack.c.h.b16 %v187
    %v731 = vunpack.c.l.b16 %v188
    %v732 = vunpack.c.h.b16 %v188
    %v733 = vunpack.c.l.b16 %v189
    %v734 = vunpack.c.h.b16 %v189
    %v735 = vunpack.c.l.b16 %v190
    %v736 = vunpack.c.h.b16 %v190
    %v737 = vunpack.c.l.b16 %v191
    %v738 = vunpack.c.h.b16 %v191
    %v739 = vunpack.c.l.b16 %v192
    %v740 = vunpack.c.h.b16 %v192
    %v741 = vunpack.c.l.b16 %v193
    %v742 = vunpack.c.h.b16 %v193
    %v743 = vunpack.c.l.b16 %v194
    %v744 = vunpack.c.h.b16 %v194
    %v745 = vunpack.c.l.b16 %v195
    %v746 = vunpack.c.h.b16 %v195
    %v747 = vunpack.c.l.b16 %v196
    %v748 = vunpack.c.h.b16 %v196
    %v749 = vunpack.c.l.b16 %v197
    %v750 = vunpack.c.h.b16 %v197
    %v751 = vunpack.c.l.b16 %v198
    %v752 = vunpack.c.h.b16 %v198
    %v753 = vunpack.c.l.b16 %v199
    %v754 = vunpack.c.h.b16 %v199
    %v755 = vunpack.c.l.b16 %v200
    %v756 = vunpack.c.h.b16 %v200
    %v757 = vunpack.c.l.b16 %v201
    %v758 = vunpack.c.h.b16 %v201
    %v759 = vunpack.c.l.b16 %v202
    %v760 = vunpack.c.h.b16 %v202
    %v761 = vunpack.c.l.b16 %v203
    %v762 = vunpack.c.h.b16 %v203
    %v763 = vunpack.c.l.b16 %v204
    %v764 = vunpack.c.h.b16 %v204
    %v765 = vunpack.c.l.b16 %v205
    %v766 = vunpack.c.h.b16 %v205
    %v767 = vunpack.c.l.b16 %v206
    %v768 = vunpack.c.h.b16 %v206
    %v769 = vunpack.c.l.b16 %v207
    %v770 = vunpack.c.h.b16 %v207
    %v771 = vunpack.c.l.b16 %v208
    %v772 = vunpack.c.h.b16 %v208
    %v773 = vunpack.c.l.b16 %v209
    %v774 = vunpack.c.h.b16 %v209
    %v775 = vunpack.c.l.b16 %v210
    %v776 = vunpack.c.h.b16 %v210
    %v777 = vunpack.c.l.b16 %v211
    %v778 = vunpack.c.h.b16 %v211
    %v779 = vunpack.c.l.b16 %v212
    %v780 = vunpack.c.h.b16 %v212
    %v781 = vunpack.c.l.b16 %v213
    %v782 = vunpack.c.h.b16 %v213
    %v783 = vunpack.c.l.b16 %v214
    %v784 = vunpack.c.h.b16 %v214
    %v785 = vunpack.c.l.b16 %v215
    %v786 = vunpack.c.h.b16 %v215
    %v787 = vunpack.c.l.b16 %v216
    %v788 = vunpack.c.h.b16 %v216
    %v789 = vunpack.c.l.b16 %v217
    %v790 = vunpack.c.h.b16 %v217
    %v791 = vunpack.c.l.b16 %v218
    %v792 = vunpack.c.h.b16 %v218
    %v793 = vunpack.c.l.b16 %v219
    %v794 = vunpack.c.h.b16 %v219
    %v795 = vunpack.c.l.b16 %v220
    %v796 = vunpack.c.h.b16 %v220
    %v797 = vunpack.c.l.b16 %v221
    %v798 = vunpack.c.h.b16 %v221
    %v799 = vunpack.c.l.b16 %v222
    %v800 = vunpack.c.h.b16 %v222
    %v801 = vunpack.c.l.b16 %v223
    %v802 = vunpack.c.h.b16 %v223
    %v803 = vunpack.c.l.b16 %v224
    %v804 = vunpack.c.h.b16 %v224
    %v805 = vunpack.c.l.b16 %v225
    %v806 = vunpack.c.h.b16 %v225
    %v807 = vunpack.c.l.b16 %v226
    %v808 = vunpack.c.h.b16 %v226
    %v809 = vunpack.c.l.b16 %v227
    %v810 = vunpack.c.h.b16 %v227
    %v811 = vunpack.c.l.b16 %v228
    %v812 = vunpack.c.h.b16 %v228
    %v813 = vunpack.c.l.b16 %v229
    %v814 = vunpack.c.h.b16 %v229
    %v815 = vunpack.c.l.b16 %v230
    %v816 = vunpack.c.h.b16 %v230
    %v817 = vunpack.c.l.b16 %v231
    %v818 = vunpack.c.h.b16 %v231
    %v819 = vunpack.c.l.b16 %v232
    %v820 = vunpack.c.h.b16 %v232
    %v821 = vunpack.c.l.b16 %v233
    %v822 = vunpack.c.h.b16 %v233
    %v823 = vunpack.c.l.b16 %v234
    %v824 = vunpack.c.h.b16 %v234
    %v825 = vunpack.c.l.b16 %v235
    %v826 = vunpack.c.h.b16 %v235
    %v827 = vunpack.c.l.b16 %v236
    %v828 = vunpack.c.h.b16 %v236
    %v829 = vunpack.c.l.b16 %v237
    %v830 = vunpack.c.h.b16 %v237
    %v831 = vunpack.c.l.b16 %v238
    %v832 = vunpack.c.h.b16 %v238
    %v833 = vunpack.c.l.b16 %v239
    %v834 = vunpack.c.h.b16 %v239
    %v835 = vunpack.c.l.b16 %v240
    %v836 = vunpack.c.h.b16 %v240
    %v837 = vunpack.c.l.b16 %v241
    %v838 = vunpack.c.h.b16 %v241
    %v839 = vunpack.c.l.b16 %v242
    %v840 = vunpack.c.h.b16 %v242
    %v841 = vunpack.c.l.b16 %v243
    %v842 = vunpack.c.h.b16 %v243
    %v843 = vunpack.c.l.b16 %v244
    %v844 = vunpack.c.h.b16 %v244
    %v845 = vunpack.c.l.b16 %v245
    %v846 = vunpack.c.h.b16 %v245
    %v847 = vunpack.c.l.b16 %v246
    %v848 = vunpack.c.h.b16 %v246
    %v849 = vunpack.c.l.b16 %v247
    %v850 = vunpack.c.h.b16 %v247
    %v851 = vunpack.c.l.b16 %v248
    %v852 = vunpack.c.h.b16 %v248
    %v853 = vunpack.c.l.b16 %v249
    %v854 = vunpack.c.h.b16 %v249
    %v855 = vunpack.c.l.b16 %v250
    %v856 = vunpack.c.h.b16 %v250
    %v857 = vunpack.c.l.b16 %v251
    %v858 = vunpack.c.h.b16 %v251
    %v859 = vunpack.c.l.b16 %v252
    %v860 = vunpack.c.h.b16 %v252
    %v861 = vunpack.c.l.b16 %v253
    %v862 = vunpack.c.h.b16 %v253
    %v863 = vunpack.c.l.b16 %v254
    %v864 = vunpack.c.h.b16 %v254
    %v865 = vunpack.c.l.b16 %v255
    %v866 = vunpack.c.h.b16 %v255
    %v867 = vunpack.c.l.b16 %v256
    %v868 = vunpack.c.h.b16 %v256
    %v869 = vunpack.c.l.b16 %v257
    %v870 = vunpack.c.h.b16 %v257
    %v871 = vunpack.c.l.b16 %v258
    %v872 = vunpack.c.h.b16 %v258
    %v873 = vunpack.c.l.b16 %v259
    %v874 = vunpack.c.h.b16 %v259
    %v875 = vunpack.c.l.b16 %v260
    %v876 = vunpack.c.h.b16 %v260
    %v877 = vunpack.c.l.b16 %v261
    %v878 = vunpack.c.h.b16 %v261
    %v879 = vunpack.c.l.b16 %v262
    %v880 = vunpack.c.h.b16 %v262
    %v881 = vunpack.c.l.b16 %v263
    %v882 = vunpack.c.h.b16 %v263
    %v883 = vunpack.c.l.b16 %v264
    %v884 = vunpack.c.h.b16 %v264
    %v885 = vunpack.c.l.b16 %v265
    %v886 = vunpack.c.h.b16 %v265
    %v887 = vunpack.c.l.b16 %v266
    %v888 = vunpack.c.h.b16 %v266
    %v889 = vunpack.c.l.b16 %v267
    %v890 = vunpack.c.h.b16 %v267
    %v891 = vunpack.c.l.b16 %v268
    %v892 = vunpack.c.h.b16 %v268
    %v893 = vunpack.c.l.b16 %v269
    %v894 = vunpack.c.h.b16 %v269
    %v895 = vunpack.c.l.b16 %v270
    %v896 = vunpack.c.h.b16 %v270
    %v897 = vunpack.c.l.b16 %v271
    %v898 = vunpack.c.h.b16 %v271
    %v899 = vunpack.c.l.b16 %v272
    %v900 = vunpack.c.h.b16 %v272
    %v901 = vpack.c.b16 %v521, %v517
    %v902 = vpack.c.b16 %v522, %v518
    %v903 = vpack.c.b16 %v523, %v519
    %v904 = vpack.c.b16 %v524, %v520
    %v905 = vpack.c.b16 %v529, %v525
    %v906 = vpack.c.b16 %v530, %v526
    %v907 = vpack.c.b16 %v531, %v527
    %v908 = vpack.c.b16 %v532, %v528
    %v909 = vpack.c.b16 %v537, %v533
    %v910 = vpack.c.b16 %v538, %v534
    %v911 = vpack.c.b16 %v539, %v535
    %v912 = vpack.c.b16 %v540, %v536
    %v913 = vpack.c.b16 %v545, %v541
    %v914 = vpack.c.b16 %v546, %v542
    %v915 = vpack.c.b16 %v547, %v543
    %v916 = vpack.c.b16 %v548, %v544
    %v917 = vpack.c.b16 %v553, %v549
    %v918 = vpack.c.b16 %v554, %v550
    %v919 = vpack.c.b16 %v555, %v551
    %v920 = vpack.c.b16 %v556, %v552
    %v921 = vpack.c.b16 %v561, %v557
    %v922 = vpack.c.b16 %v562, %v558
    %v923 = vpack.c.b16 %v563, %v559
    %v924 = vpack.c.b16 %v564, %v560
    %v925 = vpack.c.b16 %v569, %v565
    %v926 = vpack.c.b16 %v570, %v566
    %v927 = vpack.c.b16 %v571, %v567
    %v928 = vpack.c.b16 %v572, %v568
    %v929 = vpack.c.b16 %v577, %v573
    %v930 = vpack.c.b16 %v578, %v574
    %v931 = vpack.c.b16 %v579, %v575
    %v932 = vpack.c.b16 %v580, %v576
    %v933 = vpack.c.b16 %v585, %v581
    %v934 = vpack.c.b16 %v586, %v582
    %v935 = vpack.c.b16 %v587, %v583
    %v936 = vpack.c.b16 %v588, %v584
    %v937 = vpack.c.b16 %v593, %v589
    %v938 = vpack.c.b16 %v594, %v590
    %v939 = vpack.c.b16 %v595, %v591
    %v940 = vpack.c.b16 %v596, %v592
    %v941 = vpack.c.b16 %v601, %v597
    %v942 = vpack.c.b16 %v602, %v598
    %v943 = vpack.c.b16 %v603, %v599
    %v944 = vpack.c.b16 %v604, %v600
    %v945 = vpack.c.b16 %v609, %v605
    %v946 = vpack.c.b16 %v610, %v606
    %v947 = vpack.c.b16 %v611, %v607
    %v948 = vpack.c.b16 %v612, %v608
    %v949 = vpack.c.b16 %v617, %v613
    %v950 = vpack.c.b16 %v618, %v614
    %v951 = vpack.c.b16 %v619, %v615
    %v952 = vpack.c.b16 %v620, %v616
    %v953 = vpack.c.b16 %v625, %v621
    %v954 = vpack.c.b16 %v626, %v622
    %v955 = vpack.c.b16 %v627, %v623
    %v956 = vpack.c.b16 %v628, %v624
    %v957 = vpack.c.b16 %v633, %v629
    %v958 = vpack.c.b16 %v634, %v630
    %v959 = vpack.c.b16 %v635, %v631
    %v960 = vpack.c.b16 %v636, %v632
    %v961 = vpack.c.b16 %v641, %v637
    %v962 = vpack.c.b16 %v642, %v638
    %v963 = vpack.c.b16 %v643, %v639
    %v964 = vpack.c.b16 %v644, %v640
    %v965 = vpack.c.b16 %v649, %v645
    %v966 = vpack.c.b16 %v650, %v646
    %v967 = vpack.c.b16 %v651, %v647
    %v968 = vpack.c.b16 %v652, %v648
    %v969 = vpack.c.b16 %v657, %v653
    %v970 = vpack.c.b16 %v658, %v654
    %v971 = vpack.c.b16 %v659, %v655
    %v972 = vpack.c.b16 %v660, %v656
    %v973 = vpack.c.b16 %v665, %v661
    %v974 = vpack.c.b16 %v666, %v662
    %v975 = vpack.c.b16 %v667, %v663
    %v976 = vpack.c.b16 %v668, %v664
    %v977 = vpack.c.b16 %v673, %v669
    %v978 = vpack.c.b16 %v674, %v670
    %v979 = vpack.c.b16 %v675, %v671
    %v980 = vpack.c.b16 %v676, %v672
    %v981 = vpack.c.b16 %v681, %v677
    %v982 = vpack.c.b16 %v682, %v678
    %v983 = vpack.c.b16 %v683, %v679
    %v984 = vpack.c.b16 %v684, %v680
    %v985 = vpack.c.b16 %v689, %v685
    %v986 = vpack.c.b16 %v690, %v686
    %v987 = vpack.c.b16 %v691, %v687
    %v988 = vpack.c.b16 %v692, %v688
    %v989 = vpack.c.b16 %v697, %v693
    %v990 = vpack.c.b16 %v698, %v694
    %v991 = vpack.c.b16 %v699, %v695
    %v992 = vpack.c.b16 %v700, %v696
    %v993 = vpack.c.b16 %v705, %v701
    %v994 = vpack.c.b16 %v706, %v702
    %v995 = vpack.c.b16 %v707, %v703
    %v996 = vpack.c.b16 %v708, %v704
    %v997 = vpack.c.b16 %v713, %v709
    %v998 = vpack.c.b16 %v714, %v710
    %v999 = vpack.c.b16 %v715, %v711
    %v1000 = vpack.c.b16 %v716, %v712
    %v1001 = vpack.c.b16 %v721, %v717
    %v1002 = vpack.c.b16 %v722, %v718
    %v1003 = vpack.c.b16 %v723, %v719
    %v1004 = vpack.c.b16 %v724, %v720
    %v1005 = vpack.c.b16 %v729, %v725
    %v1006 = vpack.c.b16 %v730, %v726
    %v1007 = vpack.c.b16 %v731, %v727
    %v1008 = vpack.c.b16 %v732, %v728
    %v1009 = vpack.c.b16 %v737, %v733
    %v1010 = vpack.c.b16 %v738, %v734
    %v1011 = vpack.c.b16 %v739, %v735
    %v1012 = vpack.c.b16 %v740, %v736
    %v1013 = vpack.c.b16 %v745, %v741
    %v1014 = vpack.c.b16 %v746, %v742
    %v1015 = vpack.c.b16 %v747, %v743
    %v1016 = vpack.c.b16 %v748, %v744
    %v1017 = vpack.c.b16 %v753, %v749
    %v1018 = vpack.c.b16 %v754, %v750
    %v1019 = vpack.c.b16 %v755, %v751
    %v1020 = vpack.c.b16 %v756, %v752
    %v1021 = vpack.c.b16 %v761, %v757
    %v1022 = vpack.c.b16 %v762, %v758
    %v1023 = vpack.c.b16 %v763, %v759
    %v1024 = vpack.c.b16 %v764, %v760
    %v1025 = vpack.c.b16 %v769, %v765
    %v1026 = vpack.c.b16 %v770, %v766
    %v1027 = vpack.c.b16 %v771, %v767
    %v1028 = vpack.c.b16 %v772, %v768
    %v1029 = vpack.c.b16 %v777, %v773
    %v1030 = vpack.c.b16 %v778, %v774
    %v1031 = vpack.c.b16 %v779, %v775
    %v1032 = vpack.c.b16 %v780, %v776
    %v1033 = vpack.c.b16 %v785, %v781
    %v1034 = vpack.c.b16 %v786, %v782
    %v1035 = vpack.c.b16 %v787, %v783
    %v1036 = vpack.c.b16 %v788, %v784
    %v1037 = vpack.c.b16 %v793, %v789
    %v1038 = vpack.c.b16 %v794, %v790
    %v1039 = vpack.c.b16 %v795, %v791
    %v1040 = vpack.c.b16 %v796, %v792
    %v1041 = vpack.c.b16 %v801, %v797
    %v1042 = vpack.c.b16 %v802, %v798
    %v1043 = vpack.c.b16 %v803, %v799
    %v1044 = vpack.c.b16 %v804, %v800
    %v1045 = vpack.c.b16 %v809, %v805
    %v1046 = vpack.c.b16 %v810, %v806
    %v1047 = vpack.c.b16 %v811, %v807
    %v1048 = vpack.c.b16 %v812, %v808
    %v1049 = vpack.c.b16 %v817, %v813
    %v1050 = vpack.c.b16 %v818, %v814
    %v1051 = vpack.c.b16 %v819, %v815
    %v1052 = vpack.c.b16 %v820, %v816
    %v1053 = vpack.c.b16 %v825, %v821
    %v1054 = vpack.c.b16 %v826, %v822
    %v1055 = vpack.c.b16 %v827, %v823
    %v1056 = vpack.c.b16 %v828, %v824
    %v1057 = vpack.c.b16 %v833, %v829
    %v1058 = vpack.c.b16 %v834, %v830
    %v1059 = vpack.c.b16 %v835, %v831
    %v1060 = vpack.c.b16 %v836, %v832
    %v1061 = vpack.c.b16 %v841, %v837
    %v1062 = vpack.c.b16 %v842, %v838
    %v1063 = vpack.c.b16 %v843, %v839
    %v1064 = vpack.c.b16 %v844, %v840
    %v1065 = vpack.c.b16 %v849, %v845
    %v1066 = vpack.c.b16 %v850, %v846
    %v1067 = vpack.c.b16 %v851, %v847
    %v1068 = vpack.c.b16 %v852, %v848
    %v1069 = vpack.c.b16 %v857, %v853
    %v1070 = vpack.c.b16 %v858, %v854
    %v1071 = vpack.c.b16 %v859, %v855
    %v1072 = vpack.c.b16 %v860, %v856
    %v1073 = vpack.c.b16 %v865, %v861
    %v1074 = vpack.c.b16 %v866, %v862
    %v1075 = vpack.c.b16 %v867, %v863
    %v1076 = vpack.c.b16 %v868, %v864
    %v1077 = vpack.c.b16 %v873, %v869
    %v1078 = vpack.c.b16 %v874, %v870
    %v1079 = vpack.c.b16 %v875, %v871
    %v1080 = vpack.c.b16 %v876, %v872
    %v1081 = vpack.c.b16 %v881, %v877
    %v1082 = vpack.c.b16 %v882, %v878
    %v1083 = vpack.c.b16 %v883, %v879
    %v1084 = vpack.c.b16 %v884, %v880
    %v1085 = vpack.c.b16 %v889, %v885
    %v1086 = vpack.c.b16 %v890, %v886
    %v1087 = vpack.c.b16 %v891, %v887
    %v1088 = vpack.c.b16 %v892, %v888
    %v1089 = vpack.c.b16 %v897, %v893
    %v1090 = vpack.c.b16 %v898, %v894
    %v1091 = vpack.c.b16 %v899, %v895
    %v1092 = vpack.c.b16 %v900, %v896
    %1285 = vmatprep.subr.bf16.mxu0 %v930
    %1286 = vmatpush1.bf16.msra.mxu0 %v929
    %1287 = vmatprep.subr.bf16.mxu0 %v926
    %1288 = vmatpush1.bf16.msra.mxu0 %v925
    %1289 = vmatprep.subr.bf16.mxu0 %v922
    %1290 = vmatpush1.bf16.msra.mxu0 %v921
    %1291 = vmatprep.subr.bf16.mxu0 %v918
    %1292 = vmatpush1.bf16.msra.mxu0 %v917
    %1293 = vmatprep.subr.bf16.mxu0 %v914
    %1294 = vmatpush1.bf16.msra.mxu0 %v913
    %1295 = vmatprep.subr.bf16.mxu0 %v910
    %1296 = vmatpush1.bf16.msra.mxu0 %v909
    %1297 = vmatprep.subr.bf16.mxu0 %v906
    %1298 = vmatpush1.bf16.msra.mxu0 %v905
    %1299 = vmatprep.subr.bf16.mxu0 %v902
    %1300 = vmatpush1.bf16.msra.mxu0 %v901
    %1301 = vmatprep.subr.bf16.mxu0 %v962
    %1302 = vmatpush2.bf16.msra.mxu0 %v961
    %1303 = vmatprep.subr.bf16.mxu0 %v958
    %1304 = vmatpush2.bf16.msra.mxu0 %v957
    %1305 = vmatprep.subr.bf16.mxu0 %v954
    %1306 = vmatpush2.bf16.msra.mxu0 %v953
    %1307 = vmatprep.subr.bf16.mxu0 %v950
    %1308 = vmatpush2.bf16.msra.mxu0 %v949
    %1309 = vmatprep.subr.bf16.mxu0 %v946
    %1310 = vmatpush2.bf16.msra.mxu0 %v945
    %1311 = vmatprep.subr.bf16.mxu0 %v942
    %1312 = vmatpush2.bf16.msra.mxu0 %v941
    %1313 = vmatprep.subr.bf16.mxu0 %v938
    %1314 = vmatpush2.bf16.msra.mxu0 %v937
    %1315 = vmatprep.subr.bf16.mxu0 %v934
    %1316 = vmatpush2.bf16.msra.mxu0 %v933
    %1317 = vmatprep.mubr.bf16.mxu0 %v314
    %1318 = vmatmul.mubr.bf16.gmra.mxu0 %v313
    %v1319 = vpop.f32.mrf.mxu0
    %v1320 = vadd.f32 %v278, %v1319
    %v1321 = vpop.f32.mrf.mxu0
    %v1322 = vadd.f32 %v282, %v1321
    %v1323 = vpop.f32.mrf.mxu0
    %v1324 = vadd.f32 %v278, %v1323
    %v1325 = vpop.f32.mrf.mxu0
    %v1326 = vadd.f32 %v282, %v1325
    %1327 = vdwg.mxu0
    %1328 = vmatprep.subr.bf16.mxu0 %v994
    %1329 = vmatpush1.bf16.msra.mxu0 %v993
    %1330 = vmatprep.subr.bf16.mxu0 %v990
    %1331 = vmatpush1.bf16.msra.mxu0 %v989
    %1332 = vmatprep.subr.bf16.mxu0 %v986
    %1333 = vmatpush1.bf16.msra.mxu0 %v985
    %1334 = vmatprep.subr.bf16.mxu0 %v982
    %1335 = vmatpush1.bf16.msra.mxu0 %v981
    %1336 = vmatprep.subr.bf16.mxu0 %v978
    %1337 = vmatpush1.bf16.msra.mxu0 %v977
    %1338 = vmatprep.subr.bf16.mxu0 %v974
    %1339 = vmatpush1.bf16.msra.mxu0 %v973
    %1340 = vmatprep.subr.bf16.mxu0 %v970
    %1341 = vmatpush1.bf16.msra.mxu0 %v969
    %1342 = vmatprep.subr.bf16.mxu0 %v966
    %1343 = vmatpush1.bf16.msra.mxu0 %v965
    %1344 = vmatprep.subr.bf16.mxu0 %v1026
    %1345 = vmatpush2.bf16.msra.mxu0 %v1025
    %1346 = vmatprep.subr.bf16.mxu0 %v1022
    %1347 = vmatpush2.bf16.msra.mxu0 %v1021
    %1348 = vmatprep.subr.bf16.mxu0 %v1018
    %1349 = vmatpush2.bf16.msra.mxu0 %v1017
    %1350 = vmatprep.subr.bf16.mxu0 %v1014
    %1351 = vmatpush2.bf16.msra.mxu0 %v1013
    %1352 = vmatprep.subr.bf16.mxu0 %v1010
    %1353 = vmatpush2.bf16.msra.mxu0 %v1009
    %1354 = vmatprep.subr.bf16.mxu0 %v1006
    %1355 = vmatpush2.bf16.msra.mxu0 %v1005
    %1356 = vmatprep.subr.bf16.mxu0 %v1002
    %1357 = vmatpush2.bf16.msra.mxu0 %v1001
    %1358 = vmatprep.subr.bf16.mxu0 %v998
    %1359 = vmatpush2.bf16.msra.mxu0 %v997
    %1360 = vmatprep.mubr.bf16.mxu0 %v316
    %1361 = vmatmul.mubr.bf16.gmra.mxu0 %v315
    %v1362 = vpop.f32.mrf.mxu0
    %v1363 = vadd.f32 %v1320, %v1362
    %v1364 = vpop.f32.mrf.mxu0
    %v1365 = vadd.f32 %v1322, %v1364
    %v1366 = vpop.f32.mrf.mxu0
    %v1367 = vadd.f32 %v1324, %v1366
    %v1368 = vpop.f32.mrf.mxu0
    %v1369 = vadd.f32 %v1326, %v1368
    %1370 = vdwg.mxu0
    %1371 = vmatprep.subr.bf16.mxu0 %v1058
    %1372 = vmatpush1.bf16.msra.mxu0 %v1057
    %1373 = vmatprep.subr.bf16.mxu0 %v1054
    %1374 = vmatpush1.bf16.msra.mxu0 %v1053
    %1375 = vmatprep.subr.bf16.mxu0 %v1050
    %1376 = vmatpush1.bf16.msra.mxu0 %v1049
    %1377 = vmatprep.subr.bf16.mxu0 %v1046
    %1378 = vmatpush1.bf16.msra.mxu0 %v1045
    %1379 = vmatprep.subr.bf16.mxu0 %v1042
    %1380 = vmatpush1.bf16.msra.mxu0 %v1041
    %1381 = vmatprep.subr.bf16.mxu0 %v1038
    %1382 = vmatpush1.bf16.msra.mxu0 %v1037
    %1383 = vmatprep.subr.bf16.mxu0 %v1034
    %1384 = vmatpush1.bf16.msra.mxu0 %v1033
    %1385 = vmatprep.subr.bf16.mxu0 %v1030
    %1386 = vmatpush1.bf16.msra.mxu0 %v1029
    %1387 = vmatprep.subr.bf16.mxu0 %v1090
    %1388 = vmatpush2.bf16.msra.mxu0 %v1089
    %1389 = vmatprep.subr.bf16.mxu0 %v1086
    %1390 = vmatpush2.bf16.msra.mxu0 %v1085
    %1391 = vmatprep.subr.bf16.mxu0 %v1082
    %1392 = vmatpush2.bf16.msra.mxu0 %v1081
    %1393 = vmatprep.subr.bf16.mxu0 %v1078
    %1394 = vmatpush2.bf16.msra.mxu0 %v1077
    %1395 = vmatprep.subr.bf16.mxu0 %v1074
    %1396 = vmatpush2.bf16.msra.mxu0 %v1073
    %1397 = vmatprep.subr.bf16.mxu0 %v1070
    %1398 = vmatpush2.bf16.msra.mxu0 %v1069
    %1399 = vmatprep.subr.bf16.mxu0 %v1066
    %1400 = vmatpush2.bf16.msra.mxu0 %v1065
    %1401 = vmatprep.subr.bf16.mxu0 %v1062
    %1402 = vmatpush2.bf16.msra.mxu0 %v1061
    %1403 = vmatprep.mubr.bf16.mxu0 %v318
    %1404 = vmatmul.mubr.bf16.gmra.mxu0 %v317
    %v1405 = vpop.f32.mrf.mxu0
    %v1406 = vadd.f32 %v1363, %v1405
    %v1407 = vpop.f32.mrf.mxu0
    %v1408 = vadd.f32 %v1365, %v1407
    %v1409 = vpop.f32.mrf.mxu0
    %v1410 = vadd.f32 %v1367, %v1409
    %v1411 = vpop.f32.mrf.mxu0
    %v1412 = vadd.f32 %v1369, %v1411
    %1413 = vdwg.mxu0
    %1414 = vmatprep.subr.bf16.mxu0 %v932
    %1415 = vmatpush1.bf16.msra.mxu0 %v931
    %1416 = vmatprep.subr.bf16.mxu0 %v928
    %1417 = vmatpush1.bf16.msra.mxu0 %v927
    %1418 = vmatprep.subr.bf16.mxu0 %v924
    %1419 = vmatpush1.bf16.msra.mxu0 %v923
    %1420 = vmatprep.subr.bf16.mxu0 %v920
    %1421 = vmatpush1.bf16.msra.mxu0 %v919
    %1422 = vmatprep.subr.bf16.mxu0 %v916
    %1423 = vmatpush1.bf16.msra.mxu0 %v915
    %1424 = vmatprep.subr.bf16.mxu0 %v912
    %1425 = vmatpush1.bf16.msra.mxu0 %v911
    %1426 = vmatprep.subr.bf16.mxu0 %v908
    %1427 = vmatpush1.bf16.msra.mxu0 %v907
    %1428 = vmatprep.subr.bf16.mxu0 %v904
    %1429 = vmatpush1.bf16.msra.mxu0 %v903
    %1430 = vmatprep.subr.bf16.mxu0 %v964
    %1431 = vmatpush2.bf16.msra.mxu0 %v963
    %1432 = vmatprep.subr.bf16.mxu0 %v960
    %1433 = vmatpush2.bf16.msra.mxu0 %v959
    %1434 = vmatprep.subr.bf16.mxu0 %v956
    %1435 = vmatpush2.bf16.msra.mxu0 %v955
    %1436 = vmatprep.subr.bf16.mxu0 %v952
    %1437 = vmatpush2.bf16.msra.mxu0 %v951
    %1438 = vmatprep.subr.bf16.mxu0 %v948
    %1439 = vmatpush2.bf16.msra.mxu0 %v947
    %1440 = vmatprep.subr.bf16.mxu0 %v944
    %1441 = vmatpush2.bf16.msra.mxu0 %v943
    %1442 = vmatprep.subr.bf16.mxu0 %v940
    %1443 = vmatpush2.bf16.msra.mxu0 %v939
    %1444 = vmatprep.subr.bf16.mxu0 %v936
    %1445 = vmatpush2.bf16.msra.mxu0 %v935
    %1446 = vmatprep.mubr.bf16.mxu0 %v314
    %1447 = vmatmul.mubr.bf16.gmra.mxu0 %v313
    %v1448 = vpop.f32.mrf.mxu0
    %v1449 = vadd.f32 %v286, %v1448
    %v1450 = vpop.f32.mrf.mxu0
    %v1451 = vadd.f32 %v290, %v1450
    %v1452 = vpop.f32.mrf.mxu0
    %v1453 = vadd.f32 %v286, %v1452
    %v1454 = vpop.f32.mrf.mxu0
    %v1455 = vadd.f32 %v290, %v1454
    %1456 = vdwg.mxu0
    %1457 = vmatprep.subr.bf16.mxu0 %v996
    %1458 = vmatpush1.bf16.msra.mxu0 %v995
    %1459 = vmatprep.subr.bf16.mxu0 %v992
    %1460 = vmatpush1.bf16.msra.mxu0 %v991
    %1461 = vmatprep.subr.bf16.mxu0 %v988
    %1462 = vmatpush1.bf16.msra.mxu0 %v987
    %1463 = vmatprep.subr.bf16.mxu0 %v984
    %1464 = vmatpush1.bf16.msra.mxu0 %v983
    %1465 = vmatprep.subr.bf16.mxu0 %v980
    %1466 = vmatpush1.bf16.msra.mxu0 %v979
    %1467 = vmatprep.subr.bf16.mxu0 %v976
    %1468 = vmatpush1.bf16.msra.mxu0 %v975
    %1469 = vmatprep.subr.bf16.mxu0 %v972
    %1470 = vmatpush1.bf16.msra.mxu0 %v971
    %1471 = vmatprep.subr.bf16.mxu0 %v968
    %1472 = vmatpush1.bf16.msra.mxu0 %v967
    %1473 = vmatprep.subr.bf16.mxu0 %v1028
    %1474 = vmatpush2.bf16.msra.mxu0 %v1027
    %1475 = vmatprep.subr.bf16.mxu0 %v1024
    %1476 = vmatpush2.bf16.msra.mxu0 %v1023
    %1477 = vmatprep.subr.bf16.mxu0 %v1020
    %1478 = vmatpush2.bf16.msra.mxu0 %v1019
    %1479 = vmatprep.subr.bf16.mxu0 %v1016
    %1480 = vmatpush2.bf16.msra.mxu0 %v1015
    %1481 = vmatprep.subr.bf16.mxu0 %v1012
    %1482 = vmatpush2.bf16.msra.mxu0 %v1011
    %1483 = vmatprep.subr.bf16.mxu0 %v1008
    %1484 = vmatpush2.bf16.msra.mxu0 %v1007
    %1485 = vmatprep.subr.bf16.mxu0 %v1004
    %1486 = vmatpush2.bf16.msra.mxu0 %v1003
    %1487 = vmatprep.subr.bf16.mxu0 %v1000
    %1488 = vmatpush2.bf16.msra.mxu0 %v999
    %1489 = vmatprep.mubr.bf16.mxu0 %v316
    %1490 = vmatmul.mubr.bf16.gmra.mxu0 %v315
    %v1491 = vpop.f32.mrf.mxu0
    %v1492 = vadd.f32 %v1449, %v1491
    %v1493 = vpop.f32.mrf.mxu0
    %v1494 = vadd.f32 %v1451, %v1493
    %v1495 = vpop.f32.mrf.mxu0
    %v1496 = vadd.f32 %v1453, %v1495
    %v1497 = vpop.f32.mrf.mxu0
    %v1498 = vadd.f32 %v1455, %v1497
    %1499 = vdwg.mxu0
    %1500 = vmatprep.subr.bf16.mxu0 %v1060
    %1501 = vmatpush1.bf16.msra.mxu0 %v1059
    %1502 = vmatprep.subr.bf16.mxu0 %v1056
    %1503 = vmatpush1.bf16.msra.mxu0 %v1055
    %1504 = vmatprep.subr.bf16.mxu0 %v1052
    %1505 = vmatpush1.bf16.msra.mxu0 %v1051
    %1506 = vmatprep.subr.bf16.mxu0 %v1048
    %1507 = vmatpush1.bf16.msra.mxu0 %v1047
    %1508 = vmatprep.subr.bf16.mxu0 %v1044
    %1509 = vmatpush1.bf16.msra.mxu0 %v1043
    %1510 = vmatprep.subr.bf16.mxu0 %v1040
    %1511 = vmatpush1.bf16.msra.mxu0 %v1039
    %1512 = vmatprep.subr.bf16.mxu0 %v1036
    %1513 = vmatpush1.bf16.msra.mxu0 %v1035
    %1514 = vmatprep.subr.bf16.mxu0 %v1032
    %1515 = vmatpush1.bf16.msra.mxu0 %v1031
    %1516 = vmatprep.subr.bf16.mxu0 %v1092
    %1517 = vmatpush2.bf16.msra.mxu0 %v1091
    %1518 = vmatprep.subr.bf16.mxu0 %v1088
    %1519 = vmatpush2.bf16.msra.mxu0 %v1087
    %1520 = vmatprep.subr.bf16.mxu0 %v1084
    %1521 = vmatpush2.bf16.msra.mxu0 %v1083
    %1522 = vmatprep.subr.bf16.mxu0 %v1080
    %1523 = vmatpush2.bf16.msra.mxu0 %v1079
    %1524 = vmatprep.subr.bf16.mxu0 %v1076
    %1525 = vmatpush2.bf16.msra.mxu0 %v1075
    %1526 = vmatprep.subr.bf16.mxu0 %v1072
    %1527 = vmatpush2.bf16.msra.mxu0 %v1071
    %1528 = vmatprep.subr.bf16.mxu0 %v1068
    %1529 = vmatpush2.bf16.msra.mxu0 %v1067
    %1530 = vmatprep.subr.bf16.mxu0 %v1064
    %1531 = vmatpush2.bf16.msra.mxu0 %v1063
    %1532 = vmatprep.mubr.bf16.mxu0 %v318
    %1533 = vmatmul.mubr.bf16.gmra.mxu0 %v317
    %v1534 = vpop.f32.mrf.mxu0
    %v1535 = vadd.f32 %v1492, %v1534
    %v1536 = vpop.f32.mrf.mxu0
    %v1537 = vadd.f32 %v1494, %v1536
    %v1538 = vpop.f32.mrf.mxu0
    %v1539 = vadd.f32 %v1496, %v1538
    %v1540 = vpop.f32.mrf.mxu0
    %v1541 = vadd.f32 %v1498, %v1540
    %1542 = vdwg.mxu0
    %v1543 = vmax.f32 %v1406, 0.0
    %v1544 = vmax.f32 %v1408, 0.0
    %v1545 = vmax.f32 %v1535, 0.0
    %v1546 = vmax.f32 %v1537, 0.0
    %v1547 = vmax.f32 %v1410, 0.0
    %v1548 = vmax.f32 %v1412, 0.0
    %v1549 = vmax.f32 %v1539, 0.0
    %v1550 = vmax.f32 %v1541, 0.0
    %v1551 = vpack.c.bf16 %v1547, %v1543
    %v1552 = vpack.c.bf16 %v1548, %v1544
    %v1553 = vpack.c.bf16 %v1549, %v1545
    %v1554 = vpack.c.bf16 %v1550, %v1546
    %v1555 = vld [vmem:[#allocation8] sm:$0xf]
    %v1556 = vld [vmem:[#allocation8 + $0x4] sm:$0xf]
    %v1557 = vld [vmem:[#allocation8 + $0x8] sm:$0xf]
    %v1558 = vld [vmem:[#allocation8 + $0xc] sm:$0xf]
    %v1559 = vld [vmem:[#allocation8 + $0x10] sm:$0xf]
    %v1560 = vld [vmem:[#allocation8 + $0x14] sm:$0xf]
    %v1561 = vld [vmem:[#allocation8 + $0x18] sm:$0xf]
    %v1562 = vld [vmem:[#allocation8 + $0x1c] sm:$0xf]
    %v1563 = vld [vmem:[#allocation8 + $0x20] sm:$0xf]
    %v1564 = vld [vmem:[#allocation8 + $0x24] sm:$0xf]
    %v1565 = vld [vmem:[#allocation8 + $0x28] sm:$0xf]
    %v1566 = vld [vmem:[#allocation8 + $0x2c] sm:$0xf]
    %v1567 = vld [vmem:[#allocation8 + $0x30] sm:$0xf]
    %v1568 = vld [vmem:[#allocation8 + $0x34] sm:$0xf]
    %v1569 = vld [vmem:[#allocation8 + $0x38] sm:$0xf]
    %v1570 = vld [vmem:[#allocation8 + $0x3c] sm:$0xf]
    %v1571 = vld [vmem:[#allocation8 + $0x40] sm:$0xf]
    %v1572 = vld [vmem:[#allocation8 + $0x44] sm:$0xf]
    %v1573 = vld [vmem:[#allocation8 + $0x48] sm:$0xf]
    %v1574 = vld [vmem:[#allocation8 + $0x4c] sm:$0xf]
    %v1575 = vld [vmem:[#allocation8 + $0x50] sm:$0xf]
    %v1576 = vld [vmem:[#allocation8 + $0x54] sm:$0xf]
    %v1577 = vld [vmem:[#allocation8 + $0x58] sm:$0xf]
    %v1578 = vld [vmem:[#allocation8 + $0x5c] sm:$0xf]
    %v1579 = vld [vmem:[#allocation8 + $0x60] sm:$0xf]
    %v1580 = vld [vmem:[#allocation8 + $0x64] sm:$0xf]
    %v1581 = vld [vmem:[#allocation8 + $0x68] sm:$0xf]
    %v1582 = vld [vmem:[#allocation8 + $0x6c] sm:$0xf]
    %v1583 = vld [vmem:[#allocation8 + $0x70] sm:$0xf]
    %v1584 = vld [vmem:[#allocation8 + $0x74] sm:$0xf]
    %v1585 = vld [vmem:[#allocation8 + $0x78] sm:$0xf]
    %v1586 = vld [vmem:[#allocation8 + $0x7c] sm:$0xf]
    %v1587 = vld [vmem:[#allocation8 + $0x80] sm:$0xf]
    %v1588 = vld [vmem:[#allocation8 + $0x84] sm:$0xf]
    %v1589 = vld [vmem:[#allocation8 + $0x88] sm:$0xf]
    %v1590 = vld [vmem:[#allocation8 + $0x8c] sm:$0xf]
    %v1591 = vld [vmem:[#allocation8 + $0x90] sm:$0xf]
    %v1592 = vld [vmem:[#allocation8 + $0x94] sm:$0xf]
    %v1593 = vld [vmem:[#allocation8 + $0x98] sm:$0xf]
    %v1594 = vld [vmem:[#allocation8 + $0x9c] sm:$0xf]
    %v1595 = vld [vmem:[#allocation8 + $0xa0] sm:$0xf]
    %v1596 = vld [vmem:[#allocation8 + $0xa4] sm:$0xf]
    %v1597 = vld [vmem:[#allocation8 + $0xa8] sm:$0xf]
    %v1598 = vld [vmem:[#allocation8 + $0xac] sm:$0xf]
    %v1599 = vld [vmem:[#allocation8 + $0xb0] sm:$0xf]
    %v1600 = vld [vmem:[#allocation8 + $0xb4] sm:$0xf]
    %v1601 = vld [vmem:[#allocation8 + $0xb8] sm:$0xf]
    %v1602 = vld [vmem:[#allocation8 + $0xbc] sm:$0xf]
    %v1603 = vld [vmem:[#allocation8 + $0xc0] sm:$0xf]
    %v1604 = vld [vmem:[#allocation8 + $0xc4] sm:$0xf]
    %v1605 = vld [vmem:[#allocation8 + $0xc8] sm:$0xf]
    %v1606 = vld [vmem:[#allocation8 + $0xcc] sm:$0xf]
    %v1607 = vld [vmem:[#allocation8 + $0xd0] sm:$0xf]
    %v1608 = vld [vmem:[#allocation8 + $0xd4] sm:$0xf]
    %v1609 = vld [vmem:[#allocation8 + $0xd8] sm:$0xf]
    %v1610 = vld [vmem:[#allocation8 + $0xdc] sm:$0xf]
    %v1611 = vld [vmem:[#allocation8 + $0xe0] sm:$0xf]
    %v1612 = vld [vmem:[#allocation8 + $0xe4] sm:$0xf]
    %v1613 = vld [vmem:[#allocation8 + $0xe8] sm:$0xf]
    %v1614 = vld [vmem:[#allocation8 + $0xec] sm:$0xf]
    %v1615 = vld [vmem:[#allocation8 + $0xf0] sm:$0xf]
    %v1616 = vld [vmem:[#allocation8 + $0xf4] sm:$0xf]
    %v1617 = vld [vmem:[#allocation8 + $0xf8] sm:$0xf]
    %v1618 = vld [vmem:[#allocation8 + $0xfc] sm:$0xf]
    %v1619 = vld [vmem:[%s4] sm:$0x1]
    %v1621 = vlaneseq
    %v1622 = vshrl.u32 %v1621, 7
    %v1623 = vsub.s32 0, %v1622
    %v1624 = vrot.slane %v1619, %v1623
    %v1690 = vunpack.c.l.b16 %v1555
    %v1691 = vunpack.c.l.b16 %v1556
    %v1692 = vunpack.c.l.b16 %v1557
    %v1693 = vunpack.c.l.b16 %v1558
    %v1694 = vunpack.c.l.b16 %v1559
    %v1695 = vunpack.c.l.b16 %v1560
    %v1696 = vunpack.c.l.b16 %v1561
    %v1697 = vunpack.c.l.b16 %v1562
    %v1698 = vunpack.c.l.b16 %v1563
    %v1699 = vunpack.c.l.b16 %v1564
    %v1700 = vunpack.c.l.b16 %v1565
    %v1701 = vunpack.c.l.b16 %v1566
    %v1702 = vunpack.c.l.b16 %v1567
    %v1703 = vunpack.c.l.b16 %v1568
    %v1704 = vunpack.c.l.b16 %v1569
    %v1705 = vunpack.c.l.b16 %v1570
    %v1706 = vunpack.c.l.b16 %v1571
    %v1707 = vunpack.c.l.b16 %v1572
    %v1708 = vunpack.c.l.b16 %v1573
    %v1709 = vunpack.c.l.b16 %v1574
    %v1710 = vunpack.c.l.b16 %v1575
    %v1711 = vunpack.c.l.b16 %v1576
    %v1712 = vunpack.c.l.b16 %v1577
    %v1713 = vunpack.c.l.b16 %v1578
    %v1714 = vunpack.c.l.b16 %v1579
    %v1715 = vunpack.c.l.b16 %v1580
    %v1716 = vunpack.c.l.b16 %v1581
    %v1717 = vunpack.c.l.b16 %v1582
    %v1718 = vunpack.c.l.b16 %v1583
    %v1719 = vunpack.c.l.b16 %v1584
    %v1720 = vunpack.c.l.b16 %v1585
    %v1721 = vunpack.c.l.b16 %v1586
    %v1722 = vunpack.c.l.b16 %v1587
    %v1723 = vunpack.c.l.b16 %v1588
    %v1724 = vunpack.c.l.b16 %v1589
    %v1725 = vunpack.c.l.b16 %v1590
    %v1726 = vunpack.c.l.b16 %v1591
    %v1727 = vunpack.c.l.b16 %v1592
    %v1728 = vunpack.c.l.b16 %v1593
    %v1729 = vunpack.c.l.b16 %v1594
    %v1730 = vunpack.c.l.b16 %v1595
    %v1731 = vunpack.c.l.b16 %v1596
    %v1732 = vunpack.c.l.b16 %v1597
    %v1733 = vunpack.c.l.b16 %v1598
    %v1734 = vunpack.c.l.b16 %v1599
    %v1735 = vunpack.c.l.b16 %v1600
    %v1736 = vunpack.c.l.b16 %v1601
    %v1737 = vunpack.c.l.b16 %v1602
    %v1738 = vunpack.c.l.b16 %v1603
    %v1739 = vunpack.c.l.b16 %v1604
    %v1740 = vunpack.c.l.b16 %v1605
    %v1741 = vunpack.c.l.b16 %v1606
    %v1742 = vunpack.c.l.b16 %v1607
    %v1743 = vunpack.c.l.b16 %v1608
    %v1744 = vunpack.c.l.b16 %v1609
    %v1745 = vunpack.c.l.b16 %v1610
    %v1746 = vunpack.c.l.b16 %v1611
    %v1747 = vunpack.c.l.b16 %v1612
    %v1748 = vunpack.c.l.b16 %v1613
    %v1749 = vunpack.c.l.b16 %v1614
    %v1750 = vunpack.c.l.b16 %v1615
    %v1751 = vunpack.c.l.b16 %v1616
    %v1752 = vunpack.c.l.b16 %v1617
    %v1753 = vunpack.c.l.b16 %v1618
    %v1754 = vpack.c.b16 %v1691, %v1690
    %v1755 = vpack.c.b16 %v1693, %v1692
    %v1756 = vpack.c.b16 %v1695, %v1694
    %v1757 = vpack.c.b16 %v1697, %v1696
    %v1758 = vpack.c.b16 %v1699, %v1698
    %v1759 = vpack.c.b16 %v1701, %v1700
    %v1760 = vpack.c.b16 %v1703, %v1702
    %v1761 = vpack.c.b16 %v1705, %v1704
    %v1762 = vpack.c.b16 %v1707, %v1706
    %v1763 = vpack.c.b16 %v1709, %v1708
    %v1764 = vpack.c.b16 %v1711, %v1710
    %v1765 = vpack.c.b16 %v1713, %v1712
    %v1766 = vpack.c.b16 %v1715, %v1714
    %v1767 = vpack.c.b16 %v1717, %v1716
    %v1768 = vpack.c.b16 %v1719, %v1718
    %v1769 = vpack.c.b16 %v1721, %v1720
    %v1770 = vpack.c.b16 %v1723, %v1722
    %v1771 = vpack.c.b16 %v1725, %v1724
    %v1772 = vpack.c.b16 %v1727, %v1726
    %v1773 = vpack.c.b16 %v1729, %v1728
    %v1774 = vpack.c.b16 %v1731, %v1730
    %v1775 = vpack.c.b16 %v1733, %v1732
    %v1776 = vpack.c.b16 %v1735, %v1734
    %v1777 = vpack.c.b16 %v1737, %v1736
    %v1778 = vpack.c.b16 %v1739, %v1738
    %v1779 = vpack.c.b16 %v1741, %v1740
    %v1780 = vpack.c.b16 %v1743, %v1742
    %v1781 = vpack.c.b16 %v1745, %v1744
    %v1782 = vpack.c.b16 %v1747, %v1746
    %v1783 = vpack.c.b16 %v1749, %v1748
    %v1784 = vpack.c.b16 %v1751, %v1750
    %v1785 = vpack.c.b16 %v1753, %v1752
    %1818 = vmatprep.subr.bf16.mxu0 0
    %1819 = vmatpush1.bf16.msra.mxu0 %v1761
    %1820 = vmatprep.subr.bf16.mxu0 0
    %1821 = vmatpush1.bf16.msra.mxu0 %v1760
    %1822 = vmatprep.subr.bf16.mxu0 0
    %1823 = vmatpush1.bf16.msra.mxu0 %v1759
    %1824 = vmatprep.subr.bf16.mxu0 0
    %1825 = vmatpush1.bf16.msra.mxu0 %v1758
    %1826 = vmatprep.subr.bf16.mxu0 0
    %1827 = vmatpush1.bf16.msra.mxu0 %v1757
    %1828 = vmatprep.subr.bf16.mxu0 0
    %1829 = vmatpush1.bf16.msra.mxu0 %v1756
    %1830 = vmatprep.subr.bf16.mxu0 0
    %1831 = vmatpush1.bf16.msra.mxu0 %v1755
    %1832 = vmatprep.subr.bf16.mxu0 0
    %1833 = vmatpush1.bf16.msra.mxu0 %v1754
    %1834 = vmatprep.subr.bf16.mxu0 0
    %1835 = vmatpush2.bf16.msra.mxu0 %v1769
    %1836 = vmatprep.subr.bf16.mxu0 0
    %1837 = vmatpush2.bf16.msra.mxu0 %v1768
    %1838 = vmatprep.subr.bf16.mxu0 0
    %1839 = vmatpush2.bf16.msra.mxu0 %v1767
    %1840 = vmatprep.subr.bf16.mxu0 0
    %1841 = vmatpush2.bf16.msra.mxu0 %v1766
    %1842 = vmatprep.subr.bf16.mxu0 0
    %1843 = vmatpush2.bf16.msra.mxu0 %v1765
    %1844 = vmatprep.subr.bf16.mxu0 0
    %1845 = vmatpush2.bf16.msra.mxu0 %v1764
    %1846 = vmatprep.subr.bf16.mxu0 0
    %1847 = vmatpush2.bf16.msra.mxu0 %v1763
    %1848 = vmatprep.subr.bf16.mxu0 0
    %1849 = vmatpush2.bf16.msra.mxu0 %v1762
    %1850 = vmatprep.mubr.bf16.mxu0 %v1552
    %1851 = vmatmul.mubr.bf16.gmra.mxu0 %v1551
    %v1852 = vpop.f32.mrf.mxu0
    %v1853 = vadd.f32 %v1624, %v1852
    %v1854 = vpop.f32.mrf.mxu0
    %v1855 = vpop.f32.mrf.mxu0
    %v1856 = vadd.f32 %v1624, %v1855
    %v1857 = vpop.f32.mrf.mxu0
    %1858 = vdwg.mxu0
    %1859 = vmatprep.subr.bf16.mxu0 0
    %1860 = vmatpush1.bf16.msra.mxu0 %v1777
    %1861 = vmatprep.subr.bf16.mxu0 0
    %1862 = vmatpush1.bf16.msra.mxu0 %v1776
    %1863 = vmatprep.subr.bf16.mxu0 0
    %1864 = vmatpush1.bf16.msra.mxu0 %v1775
    %1865 = vmatprep.subr.bf16.mxu0 0
    %1866 = vmatpush1.bf16.msra.mxu0 %v1774
    %1867 = vmatprep.subr.bf16.mxu0 0
    %1868 = vmatpush1.bf16.msra.mxu0 %v1773
    %1869 = vmatprep.subr.bf16.mxu0 0
    %1870 = vmatpush1.bf16.msra.mxu0 %v1772
    %1871 = vmatprep.subr.bf16.mxu0 0
    %1872 = vmatpush1.bf16.msra.mxu0 %v1771
    %1873 = vmatprep.subr.bf16.mxu0 0
    %1874 = vmatpush1.bf16.msra.mxu0 %v1770
    %1875 = vmatprep.subr.bf16.mxu0 0
    %1876 = vmatpush2.bf16.msra.mxu0 %v1785
    %1877 = vmatprep.subr.bf16.mxu0 0
    %1878 = vmatpush2.bf16.msra.mxu0 %v1784
    %1879 = vmatprep.subr.bf16.mxu0 0
    %1880 = vmatpush2.bf16.msra.mxu0 %v1783
    %1881 = vmatprep.subr.bf16.mxu0 0
    %1882 = vmatpush2.bf16.msra.mxu0 %v1782
    %1883 = vmatprep.subr.bf16.mxu0 0
    %1884 = vmatpush2.bf16.msra.mxu0 %v1781
    %1885 = vmatprep.subr.bf16.mxu0 0
    %1886 = vmatpush2.bf16.msra.mxu0 %v1780
    %1887 = vmatprep.subr.bf16.mxu0 0
    %1888 = vmatpush2.bf16.msra.mxu0 %v1779
    %1889 = vmatprep.subr.bf16.mxu0 0
    %1890 = vmatpush2.bf16.msra.mxu0 %v1778
    %1891 = vmatprep.mubr.bf16.mxu0 %v1554
    %1892 = vmatmul.mubr.bf16.gmra.mxu0 %v1553
    %v1893 = vpop.f32.mrf.mxu0
    %v1894 = vadd.f32 %v1853, %v1893
    %v1895 = vpop.f32.mrf.mxu0
    %v1896 = vpop.f32.mrf.mxu0
    %v1897 = vadd.f32 %v1856, %v1896
    %v1898 = vpop.f32.mrf.mxu0
    %1899 = vdwg.mxu0
    %1900 = vst [vmem:[#allocation10] sm:$0xff] %v1894
    %1901 = vst [vmem:[#allocation10 + $0x8] sm:$0xff] %v1897
    // Predicated region
    $region38: #{tpu_custom_call.1} parent=1 // pred_check
      _
    $region39: #{tpu_custom_call.1} parent=1 // pred_check_branch
      %1903 = sbr.rel (0) target = $region41
    $region40: #{tpu_custom_call.1} parent=1 // pred_region
      %s1905 = ssub.s32 256, 256
      %1906 = vsyncadd [#allocation4], %s1905
      %s1907 = sshll.u32 [#allocation10], 4
      %s1908 = int_to_ptr.vmem [resolvable:$true] %s1907
      %1913 = dma.vmem_to_hbm [thread:$0]  %s1908, 256, %s5, [#allocation4], 128, 128, 8
    $region41: #{tpu_custom_call.1} parent=1 // pred_fallthru
      _
    // Predicated region
    $region42: #{tpu_custom_call.1} parent=1 // pred_check
      _
    $region43: #{tpu_custom_call.1} parent=1 // pred_check_branch
      %1915 = sbr.rel (0) target = $region45
    $region44: #{tpu_custom_call.1} parent=1 // pred_region
      %1916 = dma.done [#allocation4], 256
    $region45: #{tpu_custom_call.1} parent=1 // pred_fallthru
      _
    %1917 = vsyncpa [#allocation3], 1
    %1918 = vsyncpa [#allocation6], 1
    %1919 = vsyncpa [#allocation9], 1
    %1920 = vsyncpa [#allocation4], 1

</llo_original>
